<compile_context>
chip_gen: v7x
topology: tpu7x:2x2x1
jax: 0.10.0
libtpu: 0.0.40
codegen_flags: <defaults>
</compile_context>

<pallas_src>
import functools

import numpy as np

import jax
import jax.numpy as jnp
from jax.experimental import pallas as pl
from jax.experimental.pallas import tpu as pltpu

_SUB = 8  # sublane group size; all stacked-operand pieces are padded to it


# ------------------------------ Pallas kernel ------------------------------ #

def _msa_fused_kernel(x1_ref, x2_ref, scat_ref, wcomb_ref, brows_ref,
                      wstack_ref, masks_ref, b21_ref, b22_ref, o_ref,
                      *, g, cin_p, cout, shifts, p2):
    lanes = g * p2                            # all batch pixels on the lane axis

    # --- (A) ConvTranspose2d(k=2,s=2) pixel-shuffle + F.pad: ONE scatter matmul
    # U[:, t*P2:(t+1)*P2] is the t-th (di,dj) sub-grid of the up-sampled/padded
    # image, still in x1-channel space (scat_* are constant 0/1 maps).
    if g == 1:
        x1_all = x1_ref[0]                    # (Cin_p, P1)
    else:                                     # aligned sublane stack of images
        x1_all = jnp.concatenate([x1_ref[b] for b in range(g)], axis=0)
    u_all = jnp.dot(x1_all, scat_ref[...],
                    preferred_element_type=jnp.float32)   # (G*Cin_p, 4*P2)

    # --- (B) channel concat + conv1 (1x1, BN, ReLU): ONE combined matmul -----
    # Per-image stacked RHS rows: [x2 ; U_0..U_3 ; upmask ; ones ; 0-pad]; the
    # host-folded LHS is [s1*w1b | cts_0..cts_3 | a | b1 | 0], so the bias map
    # is two extra contraction rows instead of a (Ch,P2) constant + VPU add.
    brows = brows_ref[...]                    # (8, P2) constant bias rows
    pieces = []
    for b in range(g):
        ub = u_all[b * cin_p:(b + 1) * cin_p, :]
        pieces.append(jnp.concatenate(
            [x2_ref[b]]
            + [ub[:, t * p2:(t + 1) * p2] for t in range(4)]
            + [brows], axis=0))               # (Kstack, P2), 8-sublane aligned
    s_all = pieces[0] if g == 1 else jnp.concatenate(pieces, axis=1)
    y = jnp.maximum(jnp.dot(wcomb_ref[...], s_all,
                            preferred_element_type=jnp.float32), 0.0)  # (Ch, L)

    # --- (C) conv2_1 + all 9 taps of conv2_2 (3x3 dilated): ONE matmul -------
    u = jnp.dot(wstack_ref[...], y,
                preferred_element_type=jnp.float32)        # (10*Cout, L)

    o1 = jnp.maximum(u[0:cout, :] + b21_ref[...], 0.0)

    # Dilated 3x3: shift each tap along the flattened-pixel (lane) axis on the
    # XLU (pltpu.roll) and zero out-of-image / cross-image lanes with the
    # per-image-tiled validity masks (VPU).
    z2 = u[5 * cout:6 * cout, :]              # center tap, always valid
    for t, s in enumerate(shifts):
        if t == 4:                            # center handled above
            continue
        blk = u[(1 + t) * cout:(2 + t) * cout, :]
        rolled = pltpu.roll(blk, (-s) % lanes, axis=1)  # rolled[:, p] = blk[:, p+s]
        z2 = z2 + rolled * masks_ref[t]
    o2 = jnp.maximum(z2 + b22_ref[...], 0.0)

    o = o1 + o2                               # (Cout, G*P2)
    for b in range(g):                        # lane-dense, vreg-aligned stores
        o_ref[b] = o[:, b * p2:(b + 1) * p2]


# --------------------- host-side constant / weight folding ----------------- #

def _prepare_constants(p, H1, W1, H2, W2, dr, images_per_step):
    """Fold BN + biases + pad/pixel-shuffle + concat into static constants."""
    wt  = np.asarray(p["wt"],  np.float64)        # (Cin, Ch, 2, 2) torch layout
    bt  = np.asarray(p["bt"],  np.float64)        # (Ch,)
    w1  = np.asarray(p["w1"],  np.float64)        # (Ch, Cin)
    w21 = np.asarray(p["w21"], np.float64)        # (Cout, Ch)
    w22 = np.asarray(p["w22"], np.float64)        # (Cout, Ch, 3, 3)
    s1,  b1  = np.asarray(p["s1"],  np.float64), np.asarray(p["b1"],  np.float64)
    s21, b21 = np.asarray(p["s21"], np.float64), np.asarray(p["b21"], np.float64)
    s22, b22 = np.asarray(p["s22"], np.float64), np.asarray(p["b22"], np.float64)

    Cin = wt.shape[0]
    Ch = Cin // 2
    P1, P2 = H1 * W1, H2 * W2
    dY, dX = H2 - 2 * H1, W2 - 2 * W1
    padT, padL = dY // 2, dX // 2                 # F.pad([dX//2, .., dY//2, ..])

    Cin_p = -(-Cin // _SUB) * _SUB                # sublane-group padded sizes
    Ch_p  = -(-Ch  // _SUB) * _SUB

    # Scatter matrices: transposed-conv pixel-shuffle + zero-pad as 0/1 matmuls,
    # concatenated along the output-pixel axis -> ONE (P1, 4*P2) matmul.
    scat = np.zeros((4, P1, P2), np.float32)
    for di in range(2):
        for dj in range(2):
            t = 2 * di + dj
            for i in range(H1):
                for j in range(W1):
                    scat[t, i * W1 + j,
                         (2 * i + di + padT) * W2 + (2 * j + dj + padL)] = 1.0
    scat_cat = np.concatenate([scat[t] for t in range(4)], axis=1)  # (P1, 4*P2)

    upmask = np.zeros((H2, W2), np.float64)
    upmask[padT:padT + 2 * H1, padL:padL + 2 * W1] = 1.0
    upmask = upmask.reshape(P2)

    # Combined conv1 LHS over the stacked RHS [x2 ; U_0..U_3 ; upmask ; ones].
    w1a, w1b = w1[:, :Ch], w1[:, Ch:]
    cts = [s1[:, None] * (w1a @ wt[:, :, di, dj].T)   # (Ch, Cin) per sub-grid
           for di in range(2) for dj in range(2)]
    Kstack = Ch_p + 4 * Cin_p + _SUB
    wcomb = np.zeros((Ch, Kstack), np.float64)
    wcomb[:, :Ch] = s1[:, None] * w1b                 # x2 half of conv1
    for t in range(4):
        off = Ch_p + t * Cin_p
        wcomb[:, off:off + Cin] = cts[t]              # up-path of conv1
    wcomb[:, Ch_p + 4 * Cin_p + 0] = s1 * (w1a @ bt)  # ConvTranspose bias (masked)
    wcomb[:, Ch_p + 4 * Cin_p + 1] = b1               # BN bias

    biasrows = np.zeros((_SUB, P2), np.float32)       # constant bias rows of RHS
    biasrows[0] = upmask
    biasrows[1] = 1.0

    # conv2_1 + 9 conv2_2 taps: one stacked head weight, BN scales folded in.
    heads = [s21[:, None] * w21]
    heads += [s22[:, None] * w22[:, :, ki, kj]
              for ki in range(3) for kj in range(3)]
    wstack = np.concatenate(heads, axis=0)            # (10*Cout, Ch)

    # Lane-shift amounts + in-image validity masks for the 9 dilated taps,
    # tiled per image for the batched (lane-concatenated) layout.
    shifts, masks = [], np.zeros((9, 1, P2), np.float32)
    rr = np.arange(H2)[:, None]
    cc = np.arange(W2)[None, :]
    for ki in range(3):
        for kj in range(3):
            t = 3 * ki + kj
            dh, dw = (ki - 1) * dr, (kj - 1) * dr
            shifts.append(dh * W2 + dw)
            ok = ((rr + dh >= 0) & (rr + dh < H2) &
                  (cc + dw >= 0) & (cc + dw < W2))
            masks[t, 0] = ok.reshape(P2).astype(np.float32)
    masks = np.tile(masks, (1, 1, images_per_step))   # (9, 1, G*P2)

    f32 = lambda a: jnp.asarray(np.asarray(a, np.float32))
    # TODO(synk): optional accuracy-gated bf16 cast of scat_cat/wcomb/wstack.
    return dict(
        scat_cat=jnp.asarray(scat_cat), wcomb=f32(wcomb),
        biasrows=jnp.asarray(biasrows), wstack=f32(wstack),
        masks=jnp.asarray(masks),
        b21=f32(b21[:, None]), b22=f32(b22[:, None]),
        shifts=tuple(shifts), Cin_p=Cin_p, Ch_p=Ch_p,
    )


# --------------------------------- forward --------------------------------- #

def msa_block_01_forward(x1, x2, params, dr=2, images_per_step=None):
    """x1: (B, Cin, H1, W1), x2: (B, Cin//2, H2, W2), NCHW -> (B, Cout, H2, W2)."""
    if dr == 1:
        raise ValueError("MSA_Block_01 only yields consistent shapes for dr != 1.")
    B, Cin, H1, W1 = x1.shape
    _, Ch, H2, W2 = x2.shape
    assert Ch == Cin // 2
    Cout = params["w21"].shape[0]
    P1, P2 = H1 * W1, H2 * W2

    if images_per_step is None:
        # Default: keep >=2 "parallel" grid blocks when B >= 2 (feeds both v7x
        # TensorCores) while still amortizing per-step overhead over ~B/2
        # images.  On single-TC chips (v5e/v6e) pass images_per_step=B.
        images_per_step = max(1, B // 2)
    if images_per_step < 1 or B % images_per_step != 0:
        images_per_step = 1
    G = images_per_step
    nsteps = B // G

    c = _prepare_constants(params, H1, W1, H2, W2, dr, G)
    Cin_p, Ch_p = c["Cin_p"], c["Ch_p"]

    # Free trailing-dim reshapes: pixels onto the lane axis; channel pads to
    # 8-sublane groups so all in-kernel concats stay vreg-aligned.
    x1f = x1.reshape(B, Cin, P1)
    x2f = x2.reshape(B, Ch, P2)
    if Cin_p != Cin:
        x1f = jnp.pad(x1f, ((0, 0), (0, Cin_p - Cin), (0, 0)))
    if Ch_p != Ch:
        x2f = jnp.pad(x2f, ((0, 0), (0, Ch_p - Ch), (0, 0)))

    kernel = functools.partial(_msa_fused_kernel, g=G, cin_p=Cin_p, cout=Cout,
                               shifts=c["shifts"], p2=P2)
    const = lambda arr, nd: pl.BlockSpec(arr.shape, (lambda i: (0,) * nd))

    out = pl.pallas_call(
        kernel,
        out_shape=jax.ShapeDtypeStruct((B, Cout, P2), jnp.float32),
        grid=(nsteps,),
        in_specs=[
            pl.BlockSpec((G, Cin_p, P1), lambda i: (i, 0, 0)),   # x1 (G images)
            pl.BlockSpec((G, Ch_p, P2), lambda i: (i, 0, 0)),    # x2 (G images)
            const(c["scat_cat"], 2),      # concatenated scatter matrices
            const(c["wcomb"], 2),         # combined conv1 LHS (bias folded)
            const(c["biasrows"], 2),      # [upmask; ones] RHS rows
            const(c["wstack"], 2),        # stacked conv2_1 + conv2_2 tap weights
            const(c["masks"], 3),         # tap validity masks (per-image tiled)
            const(c["b21"], 2),           # conv2_1 BN bias
            const(c["b22"], 2),           # conv2_2 BN bias
        ],
        out_specs=pl.BlockSpec((G, Cout, P2), lambda i: (i, 0, 0)),
        compiler_params=pltpu.CompilerParams(
            dimension_semantics=("parallel",),
            vmem_limit_bytes=32 * 1024 * 1024),
    )(x1f, x2f, c["scat_cat"], c["wcomb"], c["biasrows"],
      c["wstack"], c["masks"], c["b21"], c["b22"])

    return out.reshape(B, Cout, H2, W2)


# ------------------------- pure-JAX reference check ------------------------ #

def msa_block_01_reference(x1, x2, p, dr=2):
    B, Cin, H1, W1 = x1.shape
    _, Ch, H2, W2 = x2.shape
    hp = jax.lax.Precision.HIGHEST
    # ConvTranspose2d(Cin, Ch, k=2, s=2) + bias (non-overlapping 2x2 blocks).
    t = jnp.einsum('bcij,cokl->boikjl', x1, p["wt"], precision=hp)
    up = t.reshape(B, Ch, 2 * H1, 2 * W1) + p["bt"][None, :, None, None]
    dY, dX = H2 - 2 * H1, W2 - 2 * W1
    up = jnp.pad(up, ((0, 0), (0, 0),
                      (dY // 2, dY - dY // 2), (dX // 2, dX - dX // 2)))
    xc = jnp.concatenate([up, x2], axis=1)
    y = jnp.einsum('oc,bchw->bohw', p["w1"], xc, precision=hp)
    y = jnp.maximum(y * p["s1"][None, :, None, None]
                    + p["b1"][None, :, None, None], 0.0)
    z1 = jnp.einsum('oc,bchw->bohw', p["w21"], y, precision=hp)
    o1 = jnp.maximum(z1 * p["s21"][None, :, None, None]
                     + p["b21"][None, :, None, None], 0.0)
    z2 = jax.lax.conv_general_dilated(
        y, p["w22"], window_strides=(1, 1), padding=[(dr, dr), (dr, dr)],
        rhs_dilation=(dr, dr), dimension_numbers=('NCHW', 'OIHW', 'NCHW'),
        precision=hp)
    o2 = jnp.maximum(z2 * p["s22"][None, :, None, None]
                     + p["b22"][None, :, None, None], 0.0)
    return o1 + o2


# ----------------------------- parameter init ------------------------------ #

def init_params(key, in_channels, out_channels):
    Ch = in_channels // 2
    ks = jax.random.split(key, 5)
    eps = 1e-5
    bn_s = lambda c: jnp.full((c,), 1.0 / np.sqrt(1.0 + eps), jnp.float32)
    bn_b = lambda c: jnp.zeros((c,), jnp.float32)
    return dict(
        # ConvTranspose2d(Cin, Ch, k=2, s=2): PyTorch weight layout (Cin, Ch, 2, 2)
        wt=0.01 * jax.random.normal(ks[0], (in_channels, Ch, 2, 2), jnp.float32),
        bt=0.01 * jax.random.normal(ks[1], (Ch,), jnp.float32),
        # conv1: 1x1, PyTorch (Ch, Cin, 1, 1) squeezed to (Ch, Cin)
        w1=0.01 * jax.random.normal(ks[2], (Ch, in_channels), jnp.float32),
        s1=bn_s(Ch), b1=bn_b(Ch),
        # conv2_1: 1x1, (Cout, Ch)
        w21=0.01 * jax.random.normal(ks[3], (out_channels, Ch), jnp.float32),
        s21=bn_s(out_channels), b21=bn_b(out_channels),
        # conv2_2: 3x3 dilated, PyTorch layout (Cout, Ch, 3, 3)
        w22=0.01 * jax.random.normal(ks[4], (out_channels, Ch, 3, 3), jnp.float32),
        s22=bn_s(out_channels), b22=bn_b(out_channels),
    )


if __name__ == "__main__":
    key = jax.random.PRNGKey(0)
    k1, k2, kp = jax.random.split(key, 3)

    B, Cin, Cout = 4, 8, 8
    H1 = W1 = 7          # low-res decoder feature  -> up(x1) is 14x14
    H2 = W2 = 16         # skip-connection feature  -> padded/concat at 16x16

    x1 = jax.random.normal(k1, (B, Cin, H1, W1), jnp.float32)
    x2 = jax.random.normal(k2, (B, Cin // 2, H2, W2), jnp.float32)
    params = init_params(kp, Cin, Cout)

    # Default: 2 grid steps x 2 images/step (lane-batched) -> exercises both
    # the batch-on-lanes amortization and the multi-block "parallel" grid.
    fwd = jax.jit(functools.partial(msa_block_01_forward, params=params, dr=2))
    out = jax.block_until_ready(fwd(x1, x2))
    assert out.shape == (B, Cout, H2, W2), out.shape

    # Correctness: pure-JAX reference of the PyTorch forward (same folded BN).
    ref = msa_block_01_reference(x1, x2, params, dr=2)
    np.testing.assert_allclose(np.asarray(out), np.asarray(ref),
                               rtol=1e-3, atol=1e-5)

    print("KERNEL_OK")
</pallas_src>

<mosaic_0001>
module attributes {stable_mosaic.version = 11 : i64} {
  func.func @_msa_fused_kernel(%arg0: i32, %arg1: memref<2x8x49xf32, #tpu.memory_space<vmem>>, %arg2: memref<2x8x256xf32, #tpu.memory_space<vmem>>, %arg3: memref<49x1024xf32, #tpu.memory_space<vmem>>, %arg4: memref<4x48xf32, #tpu.memory_space<vmem>>, %arg5: memref<8x256xf32, #tpu.memory_space<vmem>>, %arg6: memref<80x4xf32, #tpu.memory_space<vmem>>, %arg7: memref<9x1x512xf32, #tpu.memory_space<vmem>>, %arg8: memref<8x1xf32, #tpu.memory_space<vmem>>, %arg9: memref<8x1xf32, #tpu.memory_space<vmem>>, %arg10: memref<2x8x256xf32, #tpu.memory_space<vmem>>) attributes {dimension_semantics = [#tpu.dimension_semantics<parallel>], iteration_bounds = array<i64: 2>, scalar_prefetch = 0 : i64, scratch_operands = 0 : i64, tpu.core_type = #tpu.core_type<tc>, window_params = [{transform_indices = @transform_0, window_bounds = array<i64: 2, 8, 49>}, {transform_indices = @transform_1, window_bounds = array<i64: 2, 8, 256>}, {pipeline_mode = #tpu.pipeline_mode<synchronous>, transform_indices = @transform_2, window_bounds = array<i64: 49, 1024>}, {pipeline_mode = #tpu.pipeline_mode<synchronous>, transform_indices = @transform_3, window_bounds = array<i64: 4, 48>}, {pipeline_mode = #tpu.pipeline_mode<synchronous>, transform_indices = @transform_4, window_bounds = array<i64: 8, 256>}, {pipeline_mode = #tpu.pipeline_mode<synchronous>, transform_indices = @transform_5, window_bounds = array<i64: 80, 4>}, {pipeline_mode = #tpu.pipeline_mode<synchronous>, transform_indices = @transform_6, window_bounds = array<i64: 9, 1, 512>}, {pipeline_mode = #tpu.pipeline_mode<synchronous>, transform_indices = @transform_7, window_bounds = array<i64: 8, 1>}, {pipeline_mode = #tpu.pipeline_mode<synchronous>, transform_indices = @transform_8, window_bounds = array<i64: 8, 1>}, {transform_indices = @transform_9, window_bounds = array<i64: 2, 8, 256>}]} {
    %c0 = arith.constant 0 : index
    %c0_0 = arith.constant 0 : index
    %c0_1 = arith.constant 0 : index
    %0 = vector.load %arg1[%c0, %c0_0, %c0_1] : memref<2x8x49xf32, #tpu.memory_space<vmem>>, vector<1x8x49xf32>
    %1 = vector.shape_cast %0 : vector<1x8x49xf32> to vector<8x49xf32>
    %c1 = arith.constant 1 : index
    %c0_2 = arith.constant 0 : index
    %c0_3 = arith.constant 0 : index
    %2 = vector.load %arg1[%c1, %c0_2, %c0_3] : memref<2x8x49xf32, #tpu.memory_space<vmem>>, vector<1x8x49xf32>
    %3 = vector.shape_cast %2 : vector<1x8x49xf32> to vector<8x49xf32>
    %4 = tpu.concatenate %1, %3 in 0 : vector<8x49xf32>, vector<8x49xf32> -> vector<16x49xf32>
    %c0_4 = arith.constant 0 : index
    %c0_5 = arith.constant 0 : index
    %5 = vector.load %arg3[%c0_4, %c0_5] : memref<49x1024xf32, #tpu.memory_space<vmem>>, vector<49x1024xf32>
    %cst = arith.constant dense<0.000000e+00> : vector<16x1024xf32>
    %6 = tpu.matmul %4, %5, %cst {dimension_numbers = #tpu.dot_dimension_numbers<[1], [0], [0], [1], [0, 0, 1, 1], [], []>} : vector<16x49xf32>, vector<49x1024xf32>, vector<16x1024xf32> -> vector<16x1024xf32>
    %c0_6 = arith.constant 0 : index
    %c0_7 = arith.constant 0 : index
    %7 = vector.load %arg5[%c0_6, %c0_7] : memref<8x256xf32, #tpu.memory_space<vmem>>, vector<8x256xf32>
    %8 = vector.extract_strided_slice %6 {offsets = [0, 0], sizes = [8, 1024], strides = [1, 1]} : vector<16x1024xf32> to vector<8x1024xf32>
    %c0_8 = arith.constant 0 : index
    %c0_9 = arith.constant 0 : index
    %c0_10 = arith.constant 0 : index
    %9 = vector.load %arg2[%c0_8, %c0_9, %c0_10] : memref<2x8x256xf32, #tpu.memory_space<vmem>>, vector<1x8x256xf32>
    %10 = vector.shape_cast %9 : vector<1x8x256xf32> to vector<8x256xf32>
    %11 = vector.extract_strided_slice %8 {offsets = [0, 0], sizes = [8, 256], strides = [1, 1]} : vector<8x1024xf32> to vector<8x256xf32>
    %12 = vector.extract_strided_slice %8 {offsets = [0, 256], sizes = [8, 256], strides = [1, 1]} : vector<8x1024xf32> to vector<8x256xf32>
    %13 = vector.extract_strided_slice %8 {offsets = [0, 512], sizes = [8, 256], strides = [1, 1]} : vector<8x1024xf32> to vector<8x256xf32>
    %14 = vector.extract_strided_slice %8 {offsets = [0, 768], sizes = [8, 256], strides = [1, 1]} : vector<8x1024xf32> to vector<8x256xf32>
    %15 = tpu.concatenate %10, %11, %12, %13, %14, %7 in 0 : vector<8x256xf32>, vector<8x256xf32>, vector<8x256xf32>, vector<8x256xf32>, vector<8x256xf32>, vector<8x256xf32> -> vector<48x256xf32>
    %16 = vector.extract_strided_slice %6 {offsets = [8, 0], sizes = [8, 1024], strides = [1, 1]} : vector<16x1024xf32> to vector<8x1024xf32>
    %c1_11 = arith.constant 1 : index
    %c0_12 = arith.constant 0 : index
    %c0_13 = arith.constant 0 : index
    %17 = vector.load %arg2[%c1_11, %c0_12, %c0_13] : memref<2x8x256xf32, #tpu.memory_space<vmem>>, vector<1x8x256xf32>
    %18 = vector.shape_cast %17 : vector<1x8x256xf32> to vector<8x256xf32>
    %19 = vector.extract_strided_slice %16 {offsets = [0, 0], sizes = [8, 256], strides = [1, 1]} : vector<8x1024xf32> to vector<8x256xf32>
    %20 = vector.extract_strided_slice %16 {offsets = [0, 256], sizes = [8, 256], strides = [1, 1]} : vector<8x1024xf32> to vector<8x256xf32>
    %21 = vector.extract_strided_slice %16 {offsets = [0, 512], sizes = [8, 256], strides = [1, 1]} : vector<8x1024xf32> to vector<8x256xf32>
    %22 = vector.extract_strided_slice %16 {offsets = [0, 768], sizes = [8, 256], strides = [1, 1]} : vector<8x1024xf32> to vector<8x256xf32>
    %23 = tpu.concatenate %18, %19, %20, %21, %22, %7 in 0 : vector<8x256xf32>, vector<8x256xf32>, vector<8x256xf32>, vector<8x256xf32>, vector<8x256xf32>, vector<8x256xf32> -> vector<48x256xf32>
    %24 = tpu.concatenate %15, %23 in 1 : vector<48x256xf32>, vector<48x256xf32> -> vector<48x512xf32>
    %c0_14 = arith.constant 0 : index
    %c0_15 = arith.constant 0 : index
    %25 = vector.load %arg4[%c0_14, %c0_15] : memref<4x48xf32, #tpu.memory_space<vmem>>, vector<4x48xf32>
    %cst_16 = arith.constant dense<0.000000e+00> : vector<4x512xf32>
    %26 = tpu.matmul %25, %24, %cst_16 {dimension_numbers = #tpu.dot_dimension_numbers<[1], [0], [0], [1], [0, 0, 1, 1], [], []>} : vector<4x48xf32>, vector<48x512xf32>, vector<4x512xf32> -> vector<4x512xf32>
    %cst_17 = arith.constant 0.000000e+00 : f32
    %27 = vector.broadcast %cst_17 : f32 to vector<4x512xf32>
    %28 = arith.maximumf %26, %27 : vector<4x512xf32>
    %c0_18 = arith.constant 0 : index
    %c0_19 = arith.constant 0 : index
    %29 = vector.load %arg6[%c0_18, %c0_19] : memref<80x4xf32, #tpu.memory_space<vmem>>, vector<80x4xf32>
    %cst_20 = arith.constant dense<0.000000e+00> : vector<80x512xf32>
    %30 = tpu.matmul %29, %28, %cst_20 {dimension_numbers = #tpu.dot_dimension_numbers<[1], [0], [0], [1], [0, 0, 1, 1], [], []>} : vector<80x4xf32>, vector<4x512xf32>, vector<80x512xf32> -> vector<80x512xf32>
    %31 = vector.extract_strided_slice %30 {offsets = [0, 0], sizes = [8, 512], strides = [1, 1]} : vector<80x512xf32> to vector<8x512xf32>
    %c0_21 = arith.constant 0 : index
    %c0_22 = arith.constant 0 : index
    %32 = vector.load %arg8[%c0_21, %c0_22] : memref<8x1xf32, #tpu.memory_space<vmem>>, vector<8x1xf32>
    %33 = vector.broadcast %32 : vector<8x1xf32> to vector<8x512xf32>
    %34 = arith.addf %31, %33 : vector<8x512xf32>
    %cst_23 = arith.constant 0.000000e+00 : f32
    %35 = vector.broadcast %cst_23 : f32 to vector<8x512xf32>
    %36 = arith.maximumf %34, %35 : vector<8x512xf32>
    %37 = vector.extract_strided_slice %30 {offsets = [40, 0], sizes = [8, 512], strides = [1, 1]} : vector<80x512xf32> to vector<8x512xf32>
    %38 = vector.extract_strided_slice %30 {offsets = [8, 0], sizes = [8, 512], strides = [1, 1]} : vector<80x512xf32> to vector<8x512xf32>
    %c34_i32 = arith.constant 34 : i32
    %39 = tpu.dynamic_rotate %38 by %c34_i32 dim 1 : vector<8x512xf32>, i32 -> vector<8x512xf32>
    %c0_24 = arith.constant 0 : index
    %c0_25 = arith.constant 0 : index
    %c0_26 = arith.constant 0 : index
    %40 = vector.load %arg7[%c0_24, %c0_25, %c0_26] : memref<9x1x512xf32, #tpu.memory_space<vmem>>, vector<1x1x512xf32>
    %41 = vector.shape_cast %40 : vector<1x1x512xf32> to vector<1x512xf32>
    %42 = vector.broadcast %41 : vector<1x512xf32> to vector<8x512xf32>
    %43 = arith.mulf %39, %42 : vector<8x512xf32>
    %44 = arith.addf %37, %43 : vector<8x512xf32>
    %45 = vector.extract_strided_slice %30 {offsets = [16, 0], sizes = [8, 512], strides = [1, 1]} : vector<80x512xf32> to vector<8x512xf32>
    %c32_i32 = arith.constant 32 : i32
    %46 = tpu.dynamic_rotate %45 by %c32_i32 dim 1 : vector<8x512xf32>, i32 -> vector<8x512xf32>
    %c1_27 = arith.constant 1 : index
    %c0_28 = arith.constant 0 : index
    %c0_29 = arith.constant 0 : index
    %47 = vector.load %arg7[%c1_27, %c0_28, %c0_29] : memref<9x1x512xf32, #tpu.memory_space<vmem>>, vector<1x1x512xf32>
    %48 = vector.shape_cast %47 : vector<1x1x512xf32> to vector<1x512xf32>
    %49 = vector.broadcast %48 : vector<1x512xf32> to vector<8x512xf32>
    %50 = arith.mulf %46, %49 : vector<8x512xf32>
    %51 = arith.addf %44, %50 : vector<8x512xf32>
    %52 = vector.extract_strided_slice %30 {offsets = [24, 0], sizes = [8, 512], strides = [1, 1]} : vector<80x512xf32> to vector<8x512xf32>
    %c30_i32 = arith.constant 30 : i32
    %53 = tpu.dynamic_rotate %52 by %c30_i32 dim 1 : vector<8x512xf32>, i32 -> vector<8x512xf32>
    %c2 = arith.constant 2 : index
    %c0_30 = arith.constant 0 : index
    %c0_31 = arith.constant 0 : index
    %54 = vector.load %arg7[%c2, %c0_30, %c0_31] : memref<9x1x512xf32, #tpu.memory_space<vmem>>, vector<1x1x512xf32>
    %55 = vector.shape_cast %54 : vector<1x1x512xf32> to vector<1x512xf32>
    %56 = vector.broadcast %55 : vector<1x512xf32> to vector<8x512xf32>
    %57 = arith.mulf %53, %56 : vector<8x512xf32>
    %58 = arith.addf %51, %57 : vector<8x512xf32>
    %59 = vector.extract_strided_slice %30 {offsets = [32, 0], sizes = [8, 512], strides = [1, 1]} : vector<80x512xf32> to vector<8x512xf32>
    %c2_i32 = arith.constant 2 : i32
    %60 = tpu.dynamic_rotate %59 by %c2_i32 dim 1 : vector<8x512xf32>, i32 -> vector<8x512xf32>
    %c3 = arith.constant 3 : index
    %c0_32 = arith.constant 0 : index
    %c0_33 = arith.constant 0 : index
    %61 = vector.load %arg7[%c3, %c0_32, %c0_33] : memref<9x1x512xf32, #tpu.memory_space<vmem>>, vector<1x1x512xf32>
    %62 = vector.shape_cast %61 : vector<1x1x512xf32> to vector<1x512xf32>
    %63 = vector.broadcast %62 : vector<1x512xf32> to vector<8x512xf32>
    %64 = arith.mulf %60, %63 : vector<8x512xf32>
    %65 = arith.addf %58, %64 : vector<8x512xf32>
    %66 = vector.extract_strided_slice %30 {offsets = [48, 0], sizes = [8, 512], strides = [1, 1]} : vector<80x512xf32> to vector<8x512xf32>
    %c510_i32 = arith.constant 510 : i32
    %67 = tpu.dynamic_rotate %66 by %c510_i32 dim 1 : vector<8x512xf32>, i32 -> vector<8x512xf32>
    %c5 = arith.constant 5 : index
    %c0_34 = arith.constant 0 : index
    %c0_35 = arith.constant 0 : index
    %68 = vector.load %arg7[%c5, %c0_34, %c0_35] : memref<9x1x512xf32, #tpu.memory_space<vmem>>, vector<1x1x512xf32>
    %69 = vector.shape_cast %68 : vector<1x1x512xf32> to vector<1x512xf32>
    %70 = vector.broadcast %69 : vector<1x512xf32> to vector<8x512xf32>
    %71 = arith.mulf %67, %70 : vector<8x512xf32>
    %72 = arith.addf %65, %71 : vector<8x512xf32>
    %73 = vector.extract_strided_slice %30 {offsets = [56, 0], sizes = [8, 512], strides = [1, 1]} : vector<80x512xf32> to vector<8x512xf32>
    %c482_i32 = arith.constant 482 : i32
    %74 = tpu.dynamic_rotate %73 by %c482_i32 dim 1 : vector<8x512xf32>, i32 -> vector<8x512xf32>
    %c6 = arith.constant 6 : index
    %c0_36 = arith.constant 0 : index
    %c0_37 = arith.constant 0 : index
    %75 = vector.load %arg7[%c6, %c0_36, %c0_37] : memref<9x1x512xf32, #tpu.memory_space<vmem>>, vector<1x1x512xf32>
    %76 = vector.shape_cast %75 : vector<1x1x512xf32> to vector<1x512xf32>
    %77 = vector.broadcast %76 : vector<1x512xf32> to vector<8x512xf32>
    %78 = arith.mulf %74, %77 : vector<8x512xf32>
    %79 = arith.addf %72, %78 : vector<8x512xf32>
    %80 = vector.extract_strided_slice %30 {offsets = [64, 0], sizes = [8, 512], strides = [1, 1]} : vector<80x512xf32> to vector<8x512xf32>
    %c480_i32 = arith.constant 480 : i32
    %81 = tpu.dynamic_rotate %80 by %c480_i32 dim 1 : vector<8x512xf32>, i32 -> vector<8x512xf32>
    %c7 = arith.constant 7 : index
    %c0_38 = arith.constant 0 : index
    %c0_39 = arith.constant 0 : index
    %82 = vector.load %arg7[%c7, %c0_38, %c0_39] : memref<9x1x512xf32, #tpu.memory_space<vmem>>, vector<1x1x512xf32>
    %83 = vector.shape_cast %82 : vector<1x1x512xf32> to vector<1x512xf32>
    %84 = vector.broadcast %83 : vector<1x512xf32> to vector<8x512xf32>
    %85 = arith.mulf %81, %84 : vector<8x512xf32>
    %86 = arith.addf %79, %85 : vector<8x512xf32>
    %87 = vector.extract_strided_slice %30 {offsets = [72, 0], sizes = [8, 512], strides = [1, 1]} : vector<80x512xf32> to vector<8x512xf32>
    %c478_i32 = arith.constant 478 : i32
    %88 = tpu.dynamic_rotate %87 by %c478_i32 dim 1 : vector<8x512xf32>, i32 -> vector<8x512xf32>
    %c8 = arith.constant 8 : index
    %c0_40 = arith.constant 0 : index
    %c0_41 = arith.constant 0 : index
    %89 = vector.load %arg7[%c8, %c0_40, %c0_41] : memref<9x1x512xf32, #tpu.memory_space<vmem>>, vector<1x1x512xf32>
    %90 = vector.shape_cast %89 : vector<1x1x512xf32> to vector<1x512xf32>
    %91 = vector.broadcast %90 : vector<1x512xf32> to vector<8x512xf32>
    %92 = arith.mulf %88, %91 : vector<8x512xf32>
    %93 = arith.addf %86, %92 : vector<8x512xf32>
    %c0_42 = arith.constant 0 : index
    %c0_43 = arith.constant 0 : index
    %94 = vector.load %arg9[%c0_42, %c0_43] : memref<8x1xf32, #tpu.memory_space<vmem>>, vector<8x1xf32>
    %95 = vector.broadcast %94 : vector<8x1xf32> to vector<8x512xf32>
    %96 = arith.addf %93, %95 : vector<8x512xf32>
    %cst_44 = arith.constant 0.000000e+00 : f32
    %97 = vector.broadcast %cst_44 : f32 to vector<8x512xf32>
    %98 = arith.maximumf %96, %97 : vector<8x512xf32>
    %99 = arith.addf %36, %98 : vector<8x512xf32>
    %100 = vector.extract_strided_slice %99 {offsets = [0, 0], sizes = [8, 256], strides = [1, 1]} : vector<8x512xf32> to vector<8x256xf32>
    %c0_45 = arith.constant 0 : index
    %c0_46 = arith.constant 0 : index
    %c0_47 = arith.constant 0 : index
    %101 = vector.load %arg10[%c0_45, %c0_46, %c0_47] : memref<2x8x256xf32, #tpu.memory_space<vmem>>, vector<1x8x256xf32>
    %102 = vector.shape_cast %101 : vector<1x8x256xf32> to vector<8x256xf32>
    %103 = vector.shape_cast %100 : vector<8x256xf32> to vector<1x8x256xf32>
    tpu.vector_store %arg10[%c0_45, %c0_46, %c0_47], %103 {strides = array<i32>} : memref<2x8x256xf32, #tpu.memory_space<vmem>>, vector<1x8x256xf32>,
    %104 = vector.extract_strided_slice %99 {offsets = [0, 256], sizes = [8, 256], strides = [1, 1]} : vector<8x512xf32> to vector<8x256xf32>
    %c1_48 = arith.constant 1 : index
    %c0_49 = arith.constant 0 : index
    %c0_50 = arith.constant 0 : index
    %105 = vector.load %arg10[%c1_48, %c0_49, %c0_50] : memref<2x8x256xf32, #tpu.memory_space<vmem>>, vector<1x8x256xf32>
    %106 = vector.shape_cast %105 : vector<1x8x256xf32> to vector<8x256xf32>
    %107 = vector.shape_cast %104 : vector<8x256xf32> to vector<1x8x256xf32>
    tpu.vector_store %arg10[%c1_48, %c0_49, %c0_50], %107 {strides = array<i32>} : memref<2x8x256xf32, #tpu.memory_space<vmem>>, vector<1x8x256xf32>,
    return
  }
  func.func @transform_0(%arg0: i32) -> (i32, i32, i32) {
    %c0_i32 = arith.constant 0 : i32
    %c0_i32_0 = arith.constant 0 : i32
    %c0_i32_1 = arith.constant 0 : i32
    return %arg0, %c0_i32, %c0_i32_0 : i32, i32, i32
  }
  func.func @transform_1(%arg0: i32) -> (i32, i32, i32) {
    %c0_i32 = arith.constant 0 : i32
    %c0_i32_0 = arith.constant 0 : i32
    %c0_i32_1 = arith.constant 0 : i32
    return %arg0, %c0_i32, %c0_i32_0 : i32, i32, i32
  }
  func.func @transform_2(%arg0: i32) -> (i32, i32) {
    %c0_i32 = arith.constant 0 : i32
    %c0_i32_0 = arith.constant 0 : i32
    %c0_i32_1 = arith.constant 0 : i32
    return %c0_i32, %c0_i32_0 : i32, i32
  }
  func.func @transform_3(%arg0: i32) -> (i32, i32) {
    %c0_i32 = arith.constant 0 : i32
    %c0_i32_0 = arith.constant 0 : i32
    %c0_i32_1 = arith.constant 0 : i32
    return %c0_i32, %c0_i32_0 : i32, i32
  }
  func.func @transform_4(%arg0: i32) -> (i32, i32) {
    %c0_i32 = arith.constant 0 : i32
    %c0_i32_0 = arith.constant 0 : i32
    %c0_i32_1 = arith.constant 0 : i32
    return %c0_i32, %c0_i32_0 : i32, i32
  }
  func.func @transform_5(%arg0: i32) -> (i32, i32) {
    %c0_i32 = arith.constant 0 : i32
    %c0_i32_0 = arith.constant 0 : i32
    %c0_i32_1 = arith.constant 0 : i32
    return %c0_i32, %c0_i32_0 : i32, i32
  }
  func.func @transform_6(%arg0: i32) -> (i32, i32, i32) {
    %c0_i32 = arith.constant 0 : i32
    %c0_i32_0 = arith.constant 0 : i32
    %c0_i32_1 = arith.constant 0 : i32
    %c0_i32_2 = arith.constant 0 : i32
    return %c0_i32, %c0_i32_0, %c0_i32_1 : i32, i32, i32
  }
  func.func @transform_7(%arg0: i32) -> (i32, i32) {
    %c0_i32 = arith.constant 0 : i32
    %c0_i32_0 = arith.constant 0 : i32
    %c0_i32_1 = arith.constant 0 : i32
    return %c0_i32, %c0_i32_0 : i32, i32
  }
  func.func @transform_8(%arg0: i32) -> (i32, i32) {
    %c0_i32 = arith.constant 0 : i32
    %c0_i32_0 = arith.constant 0 : i32
    %c0_i32_1 = arith.constant 0 : i32
    return %c0_i32, %c0_i32_0 : i32, i32
  }
  func.func @transform_9(%arg0: i32) -> (i32, i32, i32) {
    %c0_i32 = arith.constant 0 : i32
    %c0_i32_0 = arith.constant 0 : i32
    %c0_i32_1 = arith.constant 0 : i32
    return %arg0, %c0_i32, %c0_i32_0 : i32, i32, i32
  }
}

</mosaic_0001>

<llo_original>
// kernel: msa_block_01_forward.1
$region0: #{msa_block_01_forward.1}
  #allocation0 [shape = 'u32[]', space=smem, size = 0x4, offset = 0x4, fixed_abs, tag = 'smem constant byte address 0x4 - core index']
  #allocation1 [shape = 'u32[144,128]{1,0:T(1,128)}', space=vmem, size = 0x12000, scoped, tag = 'internal scratch']
  %s0 = inlined_call_operand.vmem [shape: f32[4,8,49], index: 0, kind: input, shape index: {}]
  %s1 = inlined_call_operand.vmem [shape: f32[4,8,256], index: 1, kind: input, shape index: {}]
  %s2 = inlined_call_operand.vmem [shape: f32[49,1024], index: 2, kind: input, shape index: {}]
  %s3 = inlined_call_operand.vmem [shape: f32[4,48], index: 3, kind: input, shape index: {}]
  %s4 = inlined_call_operand.vmem [shape: f32[8,256], index: 4, kind: input, shape index: {}]
  %s5 = inlined_call_operand.vmem [shape: f32[80,4], index: 5, kind: input, shape index: {}]
  %s6 = inlined_call_operand.vmem [shape: f32[9,1,512], index: 6, kind: input, shape index: {}]
  %s7 = inlined_call_operand.vmem [shape: f32[8,1], index: 7, kind: input, shape index: {}, may-alias: {7,8}]
  %s8 = inlined_call_operand.vmem [shape: f32[8,1], index: 8, kind: input, shape index: {}, may-alias: {7,8}]
  %s9 = inlined_call_operand.vmem [shape: f32[4,8,256], index: 9, kind: output, shape index: {}]
  %s10 = sld [smem:[#allocation0]]
  $region69: #{msa_block_01_forward.1} parent=0
    _
  %s12 = ssub.s32 1, %s10
  %s13 = scalar_select 0, %s12, %s10
  loop: start=0, step=1, limit=4
  $region2: #{msa_block_01_forward.1} parent=0 // loop_pre_header
    _
  $region3: #{msa_block_01_forward.1} parent=0 // loop_header
    %s15 = sphi 0, %s19
    %p16 = scmp.ge.s32.totalorder %s15, 4
    %s25 = sphi 0, %s27
    %s28 = sphi 0, %s25
    %s29 = sphi 0, %s28
    %s45 = sphi 0, %s29
    %s51 = sphi 0, %s53
    %s54 = sphi 0, %s51
    %s55 = sphi 0, %s54
    %s71 = sphi 0, %s55
    %s75 = sphi 0, %s75
    %s77 = sphi 0, %s75
    %s78 = sphi 0, %s77
    %s92 = sphi 0, %s78
    %s96 = sphi 0, %s96
    %s98 = sphi 0, %s96
    %s99 = sphi 0, %s98
    %s113 = sphi 0, %s99
    %s117 = sphi 0, %s117
    %s119 = sphi 0, %s117
    %s120 = sphi 0, %s119
    %s134 = sphi 0, %s120
    %s138 = sphi 0, %s138
    %s140 = sphi 0, %s138
    %s141 = sphi 0, %s140
    %s155 = sphi 0, %s141
    %s159 = sphi 0, %s159
    %s161 = sphi 0, %s159
    %s162 = sphi 0, %s161
    %s176 = sphi 0, %s162
    %s180 = sphi 0, %s180
    %s182 = sphi 0, %s180
    %s183 = sphi 0, %s182
    %s197 = sphi 0, %s183
    %s201 = sphi 0, %s201
    %s203 = sphi 0, %s201
    %s204 = sphi 0, %s203
    %s218 = sphi 0, %s204
    %s224 = sphi 0, %s226
    %s227 = sphi 0, %s224
    %s228 = sphi 0, %s227
    %s244 = sphi 0, %s228
  $region4: #{msa_block_01_forward.1} parent=0 // loop_header_branch
    %18 = sbr.rel (%p16) target = $region8
  $region5: #{msa_block_01_forward.1} parent=0 // loop_body
    %s20 = ssub.s32 %s15, 1
    %s21 = ssub.s32 %s15, 2
    %s22 = sadd.s32 %s15, 1
    %s23 = ssub.s32 %s15, %s22
    %p24 = scmp.eq.s32.totalorder %s23, 0
    %s26 = sadd.s32 %s25, 1
    %s27 = scalar_select %p24, %s25, %s26
    %p30 = pneg %p24
    %p31 = scmp.eq.s32.totalorder %s15, 1
    %p32 = por %p30, %p31
    %p33 = scmp.ne.s32.totalorder %s25, %s28
    %p34 = scmp.eq.s32.totalorder %s15, 0
    %p35 = por %p33, %p34
    %p36 = scmp.ne.s32.totalorder %s25, %s28
    %p37 = scmp.eq.s32.totalorder %s20, 1
    %p38 = por %p36, %p37
    %p39 = scmp.ne.s32.totalorder %s28, %s29
    %p40 = scmp.eq.s32.totalorder %s20, 0
    %p41 = por %p39, %p40
    %p42 = scmp.ne.s32.totalorder %s28, %s29
    %p43 = scmp.eq.s32.totalorder %s21, 1
    %p44 = por %p42, %p43
    %p46 = scmp.ne.s32.totalorder %s29, %s45
    %p47 = scmp.eq.s32.totalorder %s21, 0
    %p48 = por %p46, %p47
    %s49 = ssub.s32 %s15, %s22
    %p50 = scmp.eq.s32.totalorder %s49, 0
    %s52 = sadd.s32 %s51, 1
    %s53 = scalar_select %p50, %s51, %s52
    %p56 = pneg %p50
    %p57 = scmp.eq.s32.totalorder %s15, 1
    %p58 = por %p56, %p57
    %p59 = scmp.ne.s32.totalorder %s51, %s54
    %p60 = scmp.eq.s32.totalorder %s15, 0
    %p61 = por %p59, %p60
    %p62 = scmp.ne.s32.totalorder %s51, %s54
    %p63 = scmp.eq.s32.totalorder %s20, 1
    %p64 = por %p62, %p63
    %p65 = scmp.ne.s32.totalorder %s54, %s55
    %p66 = scmp.eq.s32.totalorder %s20, 0
    %p67 = por %p65, %p66
    %p68 = scmp.ne.s32.totalorder %s54, %s55
    %p69 = scmp.eq.s32.totalorder %s21, 1
    %p70 = por %p68, %p69
    %p72 = scmp.ne.s32.totalorder %s55, %s71
    %p73 = scmp.eq.s32.totalorder %s21, 0
    %p74 = por %p72, %p73
    %s76 = sadd.s32 %s75, 1
    %p79 = scmp.eq.s32.totalorder %s15, 1
    %p80 = scmp.ne.s32.totalorder %s75, %s77
    %p81 = scmp.eq.s32.totalorder %s15, 0
    %p82 = por %p80, %p81
    %p83 = scmp.ne.s32.totalorder %s75, %s77
    %p84 = scmp.eq.s32.totalorder %s20, 1
    %p85 = por %p83, %p84
    %p86 = scmp.ne.s32.totalorder %s77, %s78
    %p87 = scmp.eq.s32.totalorder %s20, 0
    %p88 = por %p86, %p87
    %p89 = scmp.ne.s32.totalorder %s77, %s78
    %p90 = scmp.eq.s32.totalorder %s21, 1
    %p91 = por %p89, %p90
    %p93 = scmp.ne.s32.totalorder %s78, %s92
    %p94 = scmp.eq.s32.totalorder %s21, 0
    %p95 = por %p93, %p94
    %s97 = sadd.s32 %s96, 1
    %p100 = scmp.eq.s32.totalorder %s15, 1
    %p101 = scmp.ne.s32.totalorder %s96, %s98
    %p102 = scmp.eq.s32.totalorder %s15, 0
    %p103 = por %p101, %p102
    %p104 = scmp.ne.s32.totalorder %s96, %s98
    %p105 = scmp.eq.s32.totalorder %s20, 1
    %p106 = por %p104, %p105
    %p107 = scmp.ne.s32.totalorder %s98, %s99
    %p108 = scmp.eq.s32.totalorder %s20, 0
    %p109 = por %p107, %p108
    %p110 = scmp.ne.s32.totalorder %s98, %s99
    %p111 = scmp.eq.s32.totalorder %s21, 1
    %p112 = por %p110, %p111
    %p114 = scmp.ne.s32.totalorder %s99, %s113
    %p115 = scmp.eq.s32.totalorder %s21, 0
    %p116 = por %p114, %p115
    %s118 = sadd.s32 %s117, 1
    %p121 = scmp.eq.s32.totalorder %s15, 1
    %p122 = scmp.ne.s32.totalorder %s117, %s119
    %p123 = scmp.eq.s32.totalorder %s15, 0
    %p124 = por %p122, %p123
    %p125 = scmp.ne.s32.totalorder %s117, %s119
    %p126 = scmp.eq.s32.totalorder %s20, 1
    %p127 = por %p125, %p126
    %p128 = scmp.ne.s32.totalorder %s119, %s120
    %p129 = scmp.eq.s32.totalorder %s20, 0
    %p130 = por %p128, %p129
    %p131 = scmp.ne.s32.totalorder %s119, %s120
    %p132 = scmp.eq.s32.totalorder %s21, 1
    %p133 = por %p131, %p132
    %p135 = scmp.ne.s32.totalorder %s120, %s134
    %p136 = scmp.eq.s32.totalorder %s21, 0
    %p137 = por %p135, %p136
    %s139 = sadd.s32 %s138, 1
    %p142 = scmp.eq.s32.totalorder %s15, 1
    %p143 = scmp.ne.s32.totalorder %s138, %s140
    %p144 = scmp.eq.s32.totalorder %s15, 0
    %p145 = por %p143, %p144
    %p146 = scmp.ne.s32.totalorder %s138, %s140
    %p147 = scmp.eq.s32.totalorder %s20, 1
    %p148 = por %p146, %p147
    %p149 = scmp.ne.s32.totalorder %s140, %s141
    %p150 = scmp.eq.s32.totalorder %s20, 0
    %p151 = por %p149, %p150
    %p152 = scmp.ne.s32.totalorder %s140, %s141
    %p153 = scmp.eq.s32.totalorder %s21, 1
    %p154 = por %p152, %p153
    %p156 = scmp.ne.s32.totalorder %s141, %s155
    %p157 = scmp.eq.s32.totalorder %s21, 0
    %p158 = por %p156, %p157
    %s160 = sadd.s32 %s159, 1
    %p163 = scmp.eq.s32.totalorder %s15, 1
    %p164 = scmp.ne.s32.totalorder %s159, %s161
    %p165 = scmp.eq.s32.totalorder %s15, 0
    %p166 = por %p164, %p165
    %p167 = scmp.ne.s32.totalorder %s159, %s161
    %p168 = scmp.eq.s32.totalorder %s20, 1
    %p169 = por %p167, %p168
    %p170 = scmp.ne.s32.totalorder %s161, %s162
    %p171 = scmp.eq.s32.totalorder %s20, 0
    %p172 = por %p170, %p171
    %p173 = scmp.ne.s32.totalorder %s161, %s162
    %p174 = scmp.eq.s32.totalorder %s21, 1
    %p175 = por %p173, %p174
    %p177 = scmp.ne.s32.totalorder %s162, %s176
    %p178 = scmp.eq.s32.totalorder %s21, 0
    %p179 = por %p177, %p178
    %s181 = sadd.s32 %s180, 1
    %p184 = scmp.eq.s32.totalorder %s15, 1
    %p185 = scmp.ne.s32.totalorder %s180, %s182
    %p186 = scmp.eq.s32.totalorder %s15, 0
    %p187 = por %p185, %p186
    %p188 = scmp.ne.s32.totalorder %s180, %s182
    %p189 = scmp.eq.s32.totalorder %s20, 1
    %p190 = por %p188, %p189
    %p191 = scmp.ne.s32.totalorder %s182, %s183
    %p192 = scmp.eq.s32.totalorder %s20, 0
    %p193 = por %p191, %p192
    %p194 = scmp.ne.s32.totalorder %s182, %s183
    %p195 = scmp.eq.s32.totalorder %s21, 1
    %p196 = por %p194, %p195
    %p198 = scmp.ne.s32.totalorder %s183, %s197
    %p199 = scmp.eq.s32.totalorder %s21, 0
    %p200 = por %p198, %p199
    %s202 = sadd.s32 %s201, 1
    %p205 = scmp.eq.s32.totalorder %s15, 1
    %p206 = scmp.ne.s32.totalorder %s201, %s203
    %p207 = scmp.eq.s32.totalorder %s15, 0
    %p208 = por %p206, %p207
    %p209 = scmp.ne.s32.totalorder %s201, %s203
    %p210 = scmp.eq.s32.totalorder %s20, 1
    %p211 = por %p209, %p210
    %p212 = scmp.ne.s32.totalorder %s203, %s204
    %p213 = scmp.eq.s32.totalorder %s20, 0
    %p214 = por %p212, %p213
    %p215 = scmp.ne.s32.totalorder %s203, %s204
    %p216 = scmp.eq.s32.totalorder %s21, 1
    %p217 = por %p215, %p216
    %p219 = scmp.ne.s32.totalorder %s204, %s218
    %p220 = scmp.eq.s32.totalorder %s21, 0
    %p221 = por %p219, %p220
    %s222 = ssub.s32 %s15, %s22
    %p223 = scmp.eq.s32.totalorder %s222, 0
    %s225 = sadd.s32 %s224, 1
    %s226 = scalar_select %p223, %s224, %s225
    %p229 = pneg %p223
    %p230 = scmp.eq.s32.totalorder %s15, 1
    %p231 = por %p229, %p230
    %p232 = scmp.ne.s32.totalorder %s224, %s227
    %p233 = scmp.eq.s32.totalorder %s15, 0
    %p234 = por %p232, %p233
    %p235 = scmp.ne.s32.totalorder %s224, %s227
    %p236 = scmp.eq.s32.totalorder %s20, 1
    %p237 = por %p235, %p236
    %p238 = scmp.ne.s32.totalorder %s227, %s228
    %p239 = scmp.eq.s32.totalorder %s20, 0
    %p240 = por %p238, %p239
    %p241 = scmp.ne.s32.totalorder %s227, %s228
    %p242 = scmp.eq.s32.totalorder %s21, 1
    %p243 = por %p241, %p242
    %p245 = scmp.ne.s32.totalorder %s228, %s244
    %p246 = scmp.eq.s32.totalorder %s21, 0
    %p247 = por %p245, %p246
    %p248 = scmp.le.s32.totalorder 1, %s15
    %p249 = scmp.lt.s32.totalorder %s15, 3
    %p250 = pnand %p248, %p249
    %p251 = pneg %p250
    // Predicated region
    $region9: #{msa_block_01_forward.1} parent=5 // pred_check
      _
    $region10: #{msa_block_01_forward.1} parent=5 // pred_check_branch
      %253 = sbr.rel (%p250) target = $region12
    $region11: #{msa_block_01_forward.1} parent=5 // pred_region
      %s254 = ssub.s32 %s15, 1
      // Predicated region
      $region13: #{msa_block_01_forward.1} parent=11 // pred_check
        %p255 = pneg %p88
      $region14: #{msa_block_01_forward.1} parent=11 // pred_check_branch
        %257 = sbr.rel (%p255) target = $region16
      $region15: #{msa_block_01_forward.1} parent=11 // pred_region
        _
      $region16: #{msa_block_01_forward.1} parent=11 // pred_fallthru
        _
      // Predicated region
      $region17: #{msa_block_01_forward.1} parent=11 // pred_check
        %p258 = pneg %p109
      $region18: #{msa_block_01_forward.1} parent=11 // pred_check_branch
        %260 = sbr.rel (%p258) target = $region20
      $region19: #{msa_block_01_forward.1} parent=11 // pred_region
        _
      $region20: #{msa_block_01_forward.1} parent=11 // pred_fallthru
        _
      // Predicated region
      $region21: #{msa_block_01_forward.1} parent=11 // pred_check
        %p261 = pneg %p130
      $region22: #{msa_block_01_forward.1} parent=11 // pred_check_branch
        %263 = sbr.rel (%p261) target = $region24
      $region23: #{msa_block_01_forward.1} parent=11 // pred_region
        _
      $region24: #{msa_block_01_forward.1} parent=11 // pred_fallthru
        _
      // Predicated region
      $region25: #{msa_block_01_forward.1} parent=11 // pred_check
        %p264 = pneg %p151
      $region26: #{msa_block_01_forward.1} parent=11 // pred_check_branch
        %266 = sbr.rel (%p264) target = $region28
      $region27: #{msa_block_01_forward.1} parent=11 // pred_region
        _
      $region28: #{msa_block_01_forward.1} parent=11 // pred_fallthru
        _
      // Predicated region
      $region29: #{msa_block_01_forward.1} parent=11 // pred_check
        %p267 = pneg %p172
      $region30: #{msa_block_01_forward.1} parent=11 // pred_check_branch
        %269 = sbr.rel (%p267) target = $region32
      $region31: #{msa_block_01_forward.1} parent=11 // pred_region
        _
      $region32: #{msa_block_01_forward.1} parent=11 // pred_fallthru
        _
      // Predicated region
      $region33: #{msa_block_01_forward.1} parent=11 // pred_check
        %p270 = pneg %p193
      $region34: #{msa_block_01_forward.1} parent=11 // pred_check_branch
        %272 = sbr.rel (%p270) target = $region36
      $region35: #{msa_block_01_forward.1} parent=11 // pred_region
        _
      $region36: #{msa_block_01_forward.1} parent=11 // pred_fallthru
        _
      // Predicated region
      $region37: #{msa_block_01_forward.1} parent=11 // pred_check
        %p273 = pneg %p214
      $region38: #{msa_block_01_forward.1} parent=11 // pred_check_branch
        %275 = sbr.rel (%p273) target = $region40
      $region39: #{msa_block_01_forward.1} parent=11 // pred_region
        _
      $region40: #{msa_block_01_forward.1} parent=11 // pred_fallthru
        _
    $region12: #{msa_block_01_forward.1} parent=5 // pred_fallthru
      _
    %p276 = scmp.lt.s32.totalorder %s15, 2
    // Predicated region
    $region41: #{msa_block_01_forward.1} parent=5 // pred_check
      %p277 = pneg %p276
    $region42: #{msa_block_01_forward.1} parent=5 // pred_check_branch
      %279 = sbr.rel (%p277) target = $region44
    $region43: #{msa_block_01_forward.1} parent=5 // pred_region
      // Predicated region
      $region45: #{msa_block_01_forward.1} parent=43 // pred_check
        %p280 = pneg %p35
      $region46: #{msa_block_01_forward.1} parent=43 // pred_check_branch
        %282 = sbr.rel (%p280) target = $region48
      $region47: #{msa_block_01_forward.1} parent=43 // pred_region
        %s283 = smul.u32 2, %s15
        %p284 = scmp.lt.s32.totalorder %s283, 3
        %s285 = scalar_select %p284, %s283, 3
        %s286 = smul.addr %s285, 8
        %s287 = scalar_lea.vmem %s0, %s286
        %s288 = smul.u32 2, %s15
      $region48: #{msa_block_01_forward.1} parent=43 // pred_fallthru
        _
      // Predicated region
      $region49: #{msa_block_01_forward.1} parent=43 // pred_check
        %p289 = pneg %p61
      $region50: #{msa_block_01_forward.1} parent=43 // pred_check_branch
        %291 = sbr.rel (%p289) target = $region52
      $region51: #{msa_block_01_forward.1} parent=43 // pred_region
        %s292 = smul.u32 2, %s15
        %p293 = scmp.lt.s32.totalorder %s292, 3
        %s294 = scalar_select %p293, %s292, 3
        %s295 = smul.addr %s294, 2
        %s296 = smul.addr %s295, 8
        %s297 = scalar_lea.vmem %s1, %s296
        %s298 = smul.u32 2, %s15
      $region52: #{msa_block_01_forward.1} parent=43 // pred_fallthru
        _
    $region44: #{msa_block_01_forward.1} parent=5 // pred_fallthru
      _
    %p299 = scmp.le.s32.totalorder 1, %s15
    %p300 = scmp.lt.s32.totalorder %s15, 3
    %p301 = pnand %p299, %p300
    %p302 = pneg %p301
    // Predicated region
    $region53: #{msa_block_01_forward.1} parent=5 // pred_check
      _
    $region54: #{msa_block_01_forward.1} parent=5 // pred_check_branch
      %304 = sbr.rel (%p301) target = $region56
    $region55: #{msa_block_01_forward.1} parent=5 // pred_region
      %s305 = ssub.s32 %s15, 1
      %s306 = smul.u32 2, %s20
      %p307 = scmp.lt.s32.totalorder %s306, 3
      %s308 = scalar_select %p307, %s306, 3
      %s309 = smul.addr %s308, 8
      %s310 = scalar_lea.vmem %s0, %s309
      %p311 = pneg %p41
      %p312 = pneg %p38
      %s313 = smul.u32 2, %s20
      %p314 = scmp.lt.s32.totalorder %s313, 3
      %s315 = scalar_select %p314, %s313, 3
      %s316 = smul.addr %s315, 2
      %s317 = smul.addr %s316, 8
      %s318 = scalar_lea.vmem %s1, %s317
      %p319 = pneg %p67
      %p320 = pneg %p64
      %p321 = pneg %p88
      %p322 = pneg %p85
      %p323 = pneg %p109
      %p324 = pneg %p106
      %p325 = pneg %p130
      %p326 = pneg %p127
      %p327 = pneg %p151
      %p328 = pneg %p148
      %p329 = pneg %p172
      %p330 = pneg %p169
      %p331 = pneg %p193
      %p332 = pneg %p190
      %p333 = pneg %p214
      %p334 = pneg %p211
      %p335 = pneg %p240
      %p336 = pneg %p237
      %s337 = smul.u32 2, %s20
      %p338 = scmp.lt.s32.totalorder %s337, 3
      %s339 = scalar_select %p338, %s337, 3
      %s340 = smul.addr %s339, 2
      %s341 = smul.addr %s340, 8
      %s342 = scalar_lea.vmem %s9, %s341
      %s343 = smul.u32 2, %s20
      %p344 = scmp.lt.s32.totalorder %s343, 3
      %s345 = scalar_select %p344, %s343, 3
      %s346 = smul.addr %s345, 8
      %s347 = scalar_lea.vmem %s0, %s346
      %s348 = smul.u32 2, %s20
      %s349 = smul.u32 2, %s20
      %p350 = scmp.lt.s32.totalorder %s349, 3
      %s351 = scalar_select %p350, %s349, 3
      %s352 = smul.addr %s351, 2
      %s353 = smul.addr %s352, 8
      %s354 = scalar_lea.vmem %s1, %s353
      %s355 = smul.u32 2, %s20
      %s356 = smul.u32 2, %s20
      %p357 = scmp.lt.s32.totalorder %s356, 3
      %s358 = scalar_select %p357, %s356, 3
      %s359 = smul.addr %s358, 2
      %s360 = smul.addr %s359, 8
      %s361 = scalar_lea.vmem %s9, %s360
      %s362 = smul.u32 2, %s20
      %v363 = vld [vmem:[%s347] sm:$0xff]
      %s364 = scalar_lea.vmem %s347, 8
      %v365 = vld [vmem:[%s364] sm:$0xff]
      %v366 = vld [vmem:[%s2] sm:$0xff]
      %v367 = vld [vmem:[%s2 + $0x8] sm:$0xff]
      %v368 = vld [vmem:[%s2 + $0x10] sm:$0xff]
      %v369 = vld [vmem:[%s2 + $0x18] sm:$0xff]
      %v370 = vld [vmem:[%s2 + $0x20] sm:$0xff]
      %v371 = vld [vmem:[%s2 + $0x28] sm:$0xff]
      %v372 = vld [vmem:[%s2 + $0x30] sm:$0xff]
      %v373 = vld [vmem:[%s2 + $0x38] sm:$0xff]
      %v374 = vld [vmem:[%s2 + $0x40] sm:$0xff]
      %v375 = vld [vmem:[%s2 + $0x48] sm:$0xff]
      %v376 = vld [vmem:[%s2 + $0x50] sm:$0xff]
      %v377 = vld [vmem:[%s2 + $0x58] sm:$0xff]
      %v378 = vld [vmem:[%s2 + $0x60] sm:$0xff]
      %v379 = vld [vmem:[%s2 + $0x68] sm:$0xff]
      %v380 = vld [vmem:[%s2 + $0x70] sm:$0xff]
      %v381 = vld [vmem:[%s2 + $0x78] sm:$0xff]
      %v382 = vld [vmem:[%s2 + $0x80] sm:$0xff]
      %v383 = vld [vmem:[%s2 + $0x88] sm:$0xff]
      %v384 = vld [vmem:[%s2 + $0x90] sm:$0xff]
      %v385 = vld [vmem:[%s2 + $0x98] sm:$0xff]
      %v386 = vld [vmem:[%s2 + $0xa0] sm:$0xff]
      %v387 = vld [vmem:[%s2 + $0xa8] sm:$0xff]
      %v388 = vld [vmem:[%s2 + $0xb0] sm:$0xff]
      %v389 = vld [vmem:[%s2 + $0xb8] sm:$0xff]
      %v390 = vld [vmem:[%s2 + $0xc0] sm:$0xff]
      %v391 = vld [vmem:[%s2 + $0xc8] sm:$0xff]
      %v392 = vld [vmem:[%s2 + $0xd0] sm:$0xff]
      %v393 = vld [vmem:[%s2 + $0xd8] sm:$0xff]
      %v394 = vld [vmem:[%s2 + $0xe0] sm:$0xff]
      %v395 = vld [vmem:[%s2 + $0xe8] sm:$0xff]
      %v396 = vld [vmem:[%s2 + $0xf0] sm:$0xff]
      %v397 = vld [vmem:[%s2 + $0xf8] sm:$0xff]
      %v398 = vld [vmem:[%s2 + $0x100] sm:$0xff]
      %v399 = vld [vmem:[%s2 + $0x108] sm:$0xff]
      %v400 = vld [vmem:[%s2 + $0x110] sm:$0xff]
      %v401 = vld [vmem:[%s2 + $0x118] sm:$0xff]
      %v402 = vld [vmem:[%s2 + $0x120] sm:$0xff]
      %v403 = vld [vmem:[%s2 + $0x128] sm:$0xff]
      %v404 = vld [vmem:[%s2 + $0x130] sm:$0xff]
      %v405 = vld [vmem:[%s2 + $0x138] sm:$0xff]
      %v406 = vld [vmem:[%s2 + $0x140] sm:$0xff]
      %v407 = vld [vmem:[%s2 + $0x148] sm:$0xff]
      %v408 = vld [vmem:[%s2 + $0x150] sm:$0xff]
      %v409 = vld [vmem:[%s2 + $0x158] sm:$0xff]
      %v410 = vld [vmem:[%s2 + $0x160] sm:$0xff]
      %v411 = vld [vmem:[%s2 + $0x168] sm:$0xff]
      %v412 = vld [vmem:[%s2 + $0x170] sm:$0xff]
      %v413 = vld [vmem:[%s2 + $0x178] sm:$0xff]
      %v414 = vld [vmem:[%s2 + $0x180] sm:$0x1]
      %v415 = vld [vmem:[%s2 + $0x188] sm:$0x1]
      %v416 = vld [vmem:[%s2 + $0x190] sm:$0x1]
      %v417 = vld [vmem:[%s2 + $0x198] sm:$0x1]
      %v418 = vld [vmem:[%s2 + $0x1a0] sm:$0x1]
      %v419 = vld [vmem:[%s2 + $0x1a8] sm:$0x1]
      %v420 = vld [vmem:[%s2 + $0x1b0] sm:$0x1]
      %v421 = vld [vmem:[%s2 + $0x1b8] sm:$0x1]
      %vm422 = vcmask 400384
      %v424 = vsel %vm422, %v363, 0
      %v427 = vsel %vm422, %v365, 0
      %vm429 = vcmask 1040384
      %v431 = vsel %vm429, %v414, 0
      %v434 = vsel %vm429, %v415, 0
      %v437 = vsel %vm429, %v416, 0
      %v440 = vsel %vm429, %v417, 0
      %v443 = vsel %vm429, %v418, 0
      %v446 = vsel %vm429, %v419, 0
      %v449 = vsel %vm429, %v420, 0
      %v452 = vsel %vm429, %v421, 0
      %454 = vmatprep.subr.mxu0 %v367
      %455 = vmatpush1.msra.mxu0 %v366
      %456 = vmatprep.subr.mxu0 %v375
      %457 = vmatpush1.msra.mxu0 %v374
      %458 = vmatprep.subr.mxu0 %v383
      %459 = vmatpush1.msra.mxu0 %v382
      %460 = vmatprep.subr.mxu0 %v391
      %461 = vmatpush1.msra.mxu0 %v390
      %462 = vmatprep.subr.mxu0 %v399
      %463 = vmatpush1.msra.mxu0 %v398
      %464 = vmatprep.subr.mxu0 %v407
      %465 = vmatpush1.msra.mxu0 %v406
      %466 = vmatprep.subr.mxu0 %v434
      %467 = vmatpush1.msra.mxu0 %v431
      %468 = vmatprep.subr.mxu0 0.0
      %469 = vmatpush1.msra.mxu0 0.0
      %470 = vmatprep.subr.mxu0 0.0
      %471 = vmatpush1.msra.mxu0 0.0
      %472 = vmatprep.subr.mxu0 0.0
      %473 = vmatpush1.msra.mxu0 0.0
      %474 = vmatprep.subr.mxu0 0.0
      %475 = vmatpush1.msra.mxu0 0.0
      %476 = vmatprep.subr.mxu0 0.0
      %477 = vmatpush1.msra.mxu0 0.0
      %478 = vmatprep.subr.mxu0 0.0
      %479 = vmatpush1.msra.mxu0 0.0
      %480 = vmatprep.subr.mxu0 0.0
      %481 = vmatpush1.msra.mxu0 0.0
      %482 = vmatprep.subr.mxu0 0.0
      %483 = vmatpush1.msra.mxu0 0.0
      %484 = vmatprep.subr.mxu0 0.0
      %485 = vmatpush1.msra.mxu0 0.0
      %486 = vmatprep.subr.mxu0 0.0
      %487 = vmatpush1.msra.mxu0 0.0
      %488 = vmatprep.subr.mxu0 0.0
      %489 = vmatpush1.msra.mxu0 0.0
      %490 = vmatprep.subr.mxu0 0.0
      %491 = vmatpush1.msra.mxu0 0.0
      %492 = vmatprep.subr.mxu0 0.0
      %493 = vmatpush1.msra.mxu0 0.0
      %494 = vmatprep.subr.mxu0 0.0
      %495 = vmatpush1.msra.mxu0 0.0
      %496 = vmatprep.subr.mxu0 0.0
      %497 = vmatpush1.msra.mxu0 0.0
      %498 = vmatprep.subr.mxu0 0.0
      %499 = vmatpush1.msra.mxu0 0.0
      %500 = vmatprep.subr.mxu0 0.0
      %501 = vmatpush1.msra.mxu0 0.0
      %502 = vmatprep.subr.mxu0 0.0
      %503 = vmatpush1.msra.mxu0 0.0
      %504 = vmatprep.subr.mxu0 0.0
      %505 = vmatpush1.msra.mxu0 0.0
      %506 = vmatprep.subr.mxu0 0.0
      %507 = vmatpush1.msra.mxu0 0.0
      %508 = vmatprep.subr.mxu0 0.0
      %509 = vmatpush1.msra.mxu0 0.0
      %510 = vmatprep.subr.mxu0 0.0
      %511 = vmatpush1.msra.mxu0 0.0
      %512 = vmatprep.subr.mxu0 0.0
      %513 = vmatpush1.msra.mxu0 0.0
      %514 = vmatprep.subr.mxu0 0.0
      %515 = vmatpush1.msra.mxu0 0.0
      %516 = vmatprep.subr.mxu0 0.0
      %517 = vmatpush1.msra.mxu0 0.0
      %518 = vmatprep.mubr.f32.mxu0 0.0
      %519 = vmatmul.mubr.f32.gmra.mrb[0].mxu0 %v424
      %v520 = vpop.f32.mrb[0].mxu0
      %v521 = vadd.f32 0.0, %v520
      %v522 = vpop.f32.mrb[0].mxu0
      %v523 = vadd.f32 0.0, %v522
      %524 = vmatprep.mubr.f32.mxu0 0.0
      %525 = vmatmul.mubr.f32.gmra.mrb[0].mxu0 %v427
      %v526 = vpop.f32.mrb[0].mxu0
      %v527 = vadd.f32 0.0, %v526
      %v528 = vpop.f32.mrb[0].mxu0
      %v529 = vadd.f32 0.0, %v528
      %530 = vdwg.mxu0
      %531 = vmatprep.subr.mxu0 %v369
      %532 = vmatpush1.msra.mxu0 %v368
      %533 = vmatprep.subr.mxu0 %v377
      %534 = vmatpush1.msra.mxu0 %v376
      %535 = vmatprep.subr.mxu0 %v385
      %536 = vmatpush1.msra.mxu0 %v384
      %537 = vmatprep.subr.mxu0 %v393
      %538 = vmatpush1.msra.mxu0 %v392
      %539 = vmatprep.subr.mxu0 %v401
      %540 = vmatpush1.msra.mxu0 %v400
      %541 = vmatprep.subr.mxu0 %v409
      %542 = vmatpush1.msra.mxu0 %v408
      %543 = vmatprep.subr.mxu0 %v440
      %544 = vmatpush1.msra.mxu0 %v437
      %545 = vmatprep.subr.mxu0 0.0
      %546 = vmatpush1.msra.mxu0 0.0
      %547 = vmatprep.subr.mxu0 0.0
      %548 = vmatpush1.msra.mxu0 0.0
      %549 = vmatprep.subr.mxu0 0.0
      %550 = vmatpush1.msra.mxu0 0.0
      %551 = vmatprep.subr.mxu0 0.0
      %552 = vmatpush1.msra.mxu0 0.0
      %553 = vmatprep.subr.mxu0 0.0
      %554 = vmatpush1.msra.mxu0 0.0
      %555 = vmatprep.subr.mxu0 0.0
      %556 = vmatpush1.msra.mxu0 0.0
      %557 = vmatprep.subr.mxu0 0.0
      %558 = vmatpush1.msra.mxu0 0.0
      %559 = vmatprep.subr.mxu0 0.0
      %560 = vmatpush1.msra.mxu0 0.0
      %561 = vmatprep.subr.mxu0 0.0
      %562 = vmatpush1.msra.mxu0 0.0
      %563 = vmatprep.subr.mxu0 0.0
      %564 = vmatpush1.msra.mxu0 0.0
      %565 = vmatprep.subr.mxu0 0.0
      %566 = vmatpush1.msra.mxu0 0.0
      %567 = vmatprep.subr.mxu0 0.0
      %568 = vmatpush1.msra.mxu0 0.0
      %569 = vmatprep.subr.mxu0 0.0
      %570 = vmatpush1.msra.mxu0 0.0
      %571 = vmatprep.subr.mxu0 0.0
      %572 = vmatpush1.msra.mxu0 0.0
      %573 = vmatprep.subr.mxu0 0.0
      %574 = vmatpush1.msra.mxu0 0.0
      %575 = vmatprep.subr.mxu0 0.0
      %576 = vmatpush1.msra.mxu0 0.0
      %577 = vmatprep.subr.mxu0 0.0
      %578 = vmatpush1.msra.mxu0 0.0
      %579 = vmatprep.subr.mxu0 0.0
      %580 = vmatpush1.msra.mxu0 0.0
      %581 = vmatprep.subr.mxu0 0.0
      %582 = vmatpush1.msra.mxu0 0.0
      %583 = vmatprep.subr.mxu0 0.0
      %584 = vmatpush1.msra.mxu0 0.0
      %585 = vmatprep.subr.mxu0 0.0
      %586 = vmatpush1.msra.mxu0 0.0
      %587 = vmatprep.subr.mxu0 0.0
      %588 = vmatpush1.msra.mxu0 0.0
      %589 = vmatprep.subr.mxu0 0.0
      %590 = vmatpush1.msra.mxu0 0.0
      %591 = vmatprep.subr.mxu0 0.0
      %592 = vmatpush1.msra.mxu0 0.0
      %593 = vmatprep.subr.mxu0 0.0
      %594 = vmatpush1.msra.mxu0 0.0
      %595 = vmatprep.mubr.f32.mxu0 0.0
      %596 = vmatmul.mubr.f32.gmra.mrb[0].mxu0 %v424
      %v597 = vpop.f32.mrb[0].mxu0
      %v598 = vadd.f32 0.0, %v597
      %v599 = vpop.f32.mrb[0].mxu0
      %v600 = vadd.f32 0.0, %v599
      %601 = vmatprep.mubr.f32.mxu0 0.0
      %602 = vmatmul.mubr.f32.gmra.mrb[0].mxu0 %v427
      %v603 = vpop.f32.mrb[0].mxu0
      %v604 = vadd.f32 0.0, %v603
      %v605 = vpop.f32.mrb[0].mxu0
      %v606 = vadd.f32 0.0, %v605
      %607 = vdwg.mxu0
      %608 = vmatprep.subr.mxu0 %v371
      %609 = vmatpush1.msra.mxu0 %v370
      %610 = vmatprep.subr.mxu0 %v379
      %611 = vmatpush1.msra.mxu0 %v378
      %612 = vmatprep.subr.mxu0 %v387
      %613 = vmatpush1.msra.mxu0 %v386
      %614 = vmatprep.subr.mxu0 %v395
      %615 = vmatpush1.msra.mxu0 %v394
      %616 = vmatprep.subr.mxu0 %v403
      %617 = vmatpush1.msra.mxu0 %v402
      %618 = vmatprep.subr.mxu0 %v411
      %619 = vmatpush1.msra.mxu0 %v410
      %620 = vmatprep.subr.mxu0 %v446
      %621 = vmatpush1.msra.mxu0 %v443
      %622 = vmatprep.subr.mxu0 0.0
      %623 = vmatpush1.msra.mxu0 0.0
      %624 = vmatprep.subr.mxu0 0.0
      %625 = vmatpush1.msra.mxu0 0.0
      %626 = vmatprep.subr.mxu0 0.0
      %627 = vmatpush1.msra.mxu0 0.0
      %628 = vmatprep.subr.mxu0 0.0
      %629 = vmatpush1.msra.mxu0 0.0
      %630 = vmatprep.subr.mxu0 0.0
      %631 = vmatpush1.msra.mxu0 0.0
      %632 = vmatprep.subr.mxu0 0.0
      %633 = vmatpush1.msra.mxu0 0.0
      %634 = vmatprep.subr.mxu0 0.0
      %635 = vmatpush1.msra.mxu0 0.0
      %636 = vmatprep.subr.mxu0 0.0
      %637 = vmatpush1.msra.mxu0 0.0
      %638 = vmatprep.subr.mxu0 0.0
      %639 = vmatpush1.msra.mxu0 0.0
      %640 = vmatprep.subr.mxu0 0.0
      %641 = vmatpush1.msra.mxu0 0.0
      %642 = vmatprep.subr.mxu0 0.0
      %643 = vmatpush1.msra.mxu0 0.0
      %644 = vmatprep.subr.mxu0 0.0
      %645 = vmatpush1.msra.mxu0 0.0
      %646 = vmatprep.subr.mxu0 0.0
      %647 = vmatpush1.msra.mxu0 0.0
      %648 = vmatprep.subr.mxu0 0.0
      %649 = vmatpush1.msra.mxu0 0.0
      %650 = vmatprep.subr.mxu0 0.0
      %651 = vmatpush1.msra.mxu0 0.0
      %652 = vmatprep.subr.mxu0 0.0
      %653 = vmatpush1.msra.mxu0 0.0
      %654 = vmatprep.subr.mxu0 0.0
      %655 = vmatpush1.msra.mxu0 0.0
      %656 = vmatprep.subr.mxu0 0.0
      %657 = vmatpush1.msra.mxu0 0.0
      %658 = vmatprep.subr.mxu0 0.0
      %659 = vmatpush1.msra.mxu0 0.0
      %660 = vmatprep.subr.mxu0 0.0
      %661 = vmatpush1.msra.mxu0 0.0
      %662 = vmatprep.subr.mxu0 0.0
      %663 = vmatpush1.msra.mxu0 0.0
      %664 = vmatprep.subr.mxu0 0.0
      %665 = vmatpush1.msra.mxu0 0.0
      %666 = vmatprep.subr.mxu0 0.0
      %667 = vmatpush1.msra.mxu0 0.0
      %668 = vmatprep.subr.mxu0 0.0
      %669 = vmatpush1.msra.mxu0 0.0
      %670 = vmatprep.subr.mxu0 0.0
      %671 = vmatpush1.msra.mxu0 0.0
      %672 = vmatprep.mubr.f32.mxu0 0.0
      %673 = vmatmul.mubr.f32.gmra.mrb[0].mxu0 %v424
      %v674 = vpop.f32.mrb[0].mxu0
      %v675 = vadd.f32 0.0, %v674
      %v676 = vpop.f32.mrb[0].mxu0
      %v677 = vadd.f32 0.0, %v676
      %678 = vmatprep.mubr.f32.mxu0 0.0
      %679 = vmatmul.mubr.f32.gmra.mrb[0].mxu0 %v427
      %v680 = vpop.f32.mrb[0].mxu0
      %v681 = vadd.f32 0.0, %v680
      %v682 = vpop.f32.mrb[0].mxu0
      %v683 = vadd.f32 0.0, %v682
      %684 = vdwg.mxu0
      %685 = vmatprep.subr.mxu0 %v373
      %686 = vmatpush1.msra.mxu0 %v372
      %687 = vmatprep.subr.mxu0 %v381
      %688 = vmatpush1.msra.mxu0 %v380
      %689 = vmatprep.subr.mxu0 %v389
      %690 = vmatpush1.msra.mxu0 %v388
      %691 = vmatprep.subr.mxu0 %v397
      %692 = vmatpush1.msra.mxu0 %v396
      %693 = vmatprep.subr.mxu0 %v405
      %694 = vmatpush1.msra.mxu0 %v404
      %695 = vmatprep.subr.mxu0 %v413
      %696 = vmatpush1.msra.mxu0 %v412
      %697 = vmatprep.subr.mxu0 %v452
      %698 = vmatpush1.msra.mxu0 %v449
      %699 = vmatprep.subr.mxu0 0.0
      %700 = vmatpush1.msra.mxu0 0.0
      %701 = vmatprep.subr.mxu0 0.0
      %702 = vmatpush1.msra.mxu0 0.0
      %703 = vmatprep.subr.mxu0 0.0
      %704 = vmatpush1.msra.mxu0 0.0
      %705 = vmatprep.subr.mxu0 0.0
      %706 = vmatpush1.msra.mxu0 0.0
      %707 = vmatprep.subr.mxu0 0.0
      %708 = vmatpush1.msra.mxu0 0.0
      %709 = vmatprep.subr.mxu0 0.0
      %710 = vmatpush1.msra.mxu0 0.0
      %711 = vmatprep.subr.mxu0 0.0
      %712 = vmatpush1.msra.mxu0 0.0
      %713 = vmatprep.subr.mxu0 0.0
      %714 = vmatpush1.msra.mxu0 0.0
      %715 = vmatprep.subr.mxu0 0.0
      %716 = vmatpush1.msra.mxu0 0.0
      %717 = vmatprep.subr.mxu0 0.0
      %718 = vmatpush1.msra.mxu0 0.0
      %719 = vmatprep.subr.mxu0 0.0
      %720 = vmatpush1.msra.mxu0 0.0
      %721 = vmatprep.subr.mxu0 0.0
      %722 = vmatpush1.msra.mxu0 0.0
      %723 = vmatprep.subr.mxu0 0.0
      %724 = vmatpush1.msra.mxu0 0.0
      %725 = vmatprep.subr.mxu0 0.0
      %726 = vmatpush1.msra.mxu0 0.0
      %727 = vmatprep.subr.mxu0 0.0
      %728 = vmatpush1.msra.mxu0 0.0
      %729 = vmatprep.subr.mxu0 0.0
      %730 = vmatpush1.msra.mxu0 0.0
      %731 = vmatprep.subr.mxu0 0.0
      %732 = vmatpush1.msra.mxu0 0.0
      %733 = vmatprep.subr.mxu0 0.0
      %734 = vmatpush1.msra.mxu0 0.0
      %735 = vmatprep.subr.mxu0 0.0
      %736 = vmatpush1.msra.mxu0 0.0
      %737 = vmatprep.subr.mxu0 0.0
      %738 = vmatpush1.msra.mxu0 0.0
      %739 = vmatprep.subr.mxu0 0.0
      %740 = vmatpush1.msra.mxu0 0.0
      %741 = vmatprep.subr.mxu0 0.0
      %742 = vmatpush1.msra.mxu0 0.0
      %743 = vmatprep.subr.mxu0 0.0
      %744 = vmatpush1.msra.mxu0 0.0
      %745 = vmatprep.subr.mxu0 0.0
      %746 = vmatpush1.msra.mxu0 0.0
      %747 = vmatprep.subr.mxu0 0.0
      %748 = vmatpush1.msra.mxu0 0.0
      %749 = vmatprep.mubr.f32.mxu0 0.0
      %750 = vmatmul.mubr.f32.gmra.mrb[0].mxu0 %v424
      %v751 = vpop.f32.mrb[0].mxu0
      %v752 = vadd.f32 0.0, %v751
      %v753 = vpop.f32.mrb[0].mxu0
      %v754 = vadd.f32 0.0, %v753
      %755 = vmatprep.mubr.f32.mxu0 0.0
      %756 = vmatmul.mubr.f32.gmra.mrb[0].mxu0 %v427
      %v757 = vpop.f32.mrb[0].mxu0
      %v758 = vadd.f32 0.0, %v757
      %v759 = vpop.f32.mrb[0].mxu0
      %v760 = vadd.f32 0.0, %v759
      %761 = vdwg.mxu0
      %v762 = vld [vmem:[%s4] sm:$0xff]
      %v763 = vld [vmem:[%s4 + $0x8] sm:$0xff]
      %v764 = vld [vmem:[%s354] sm:$0xff]
      %v765 = vld [vmem:[%s354 + $0x8] sm:$0xff]
      %s766 = scalar_lea.vmem %s354, 16
      %v767 = vld [vmem:[%s766] sm:$0xff]
      %v768 = vld [vmem:[%s766 + $0x8] sm:$0xff]
      %v769 = vld [vmem:[%s3] sm:$0xf]
      %vm770 = vcmask 392192
      %v772 = vsel %vm770, %v769, 0
      %774 = vmatprep.subr.mxu0 %v765
      %775 = vmatpush1.msra.mxu0 %v764
      %776 = vmatprep.subr.mxu0 %v523
      %777 = vmatpush1.msra.mxu0 %v521
      %778 = vmatprep.subr.mxu0 %v600
      %779 = vmatpush1.msra.mxu0 %v598
      %780 = vmatprep.subr.mxu0 %v677
      %781 = vmatpush1.msra.mxu0 %v675
      %782 = vmatprep.subr.mxu0 %v754
      %783 = vmatpush1.msra.mxu0 %v752
      %784 = vmatprep.subr.mxu0 %v763
      %785 = vmatpush1.msra.mxu0 %v762
      %786 = vmatprep.subr.mxu0 0.0
      %787 = vmatpush1.msra.mxu0 0.0
      %788 = vmatprep.subr.mxu0 0.0
      %789 = vmatpush1.msra.mxu0 0.0
      %790 = vmatprep.subr.mxu0 0.0
      %791 = vmatpush1.msra.mxu0 0.0
      %792 = vmatprep.subr.mxu0 0.0
      %793 = vmatpush1.msra.mxu0 0.0
      %794 = vmatprep.subr.mxu0 0.0
      %795 = vmatpush1.msra.mxu0 0.0
      %796 = vmatprep.subr.mxu0 0.0
      %797 = vmatpush1.msra.mxu0 0.0
      %798 = vmatprep.subr.mxu0 0.0
      %799 = vmatpush1.msra.mxu0 0.0
      %800 = vmatprep.subr.mxu0 0.0
      %801 = vmatpush1.msra.mxu0 0.0
      %802 = vmatprep.subr.mxu0 0.0
      %803 = vmatpush1.msra.mxu0 0.0
      %804 = vmatprep.subr.mxu0 0.0
      %805 = vmatpush1.msra.mxu0 0.0
      %806 = vmatprep.subr.mxu0 0.0
      %807 = vmatpush1.msra.mxu0 0.0
      %808 = vmatprep.subr.mxu0 0.0
      %809 = vmatpush1.msra.mxu0 0.0
      %810 = vmatprep.subr.mxu0 0.0
      %811 = vmatpush1.msra.mxu0 0.0
      %812 = vmatprep.subr.mxu0 0.0
      %813 = vmatpush1.msra.mxu0 0.0
      %814 = vmatprep.subr.mxu0 0.0
      %815 = vmatpush1.msra.mxu0 0.0
      %816 = vmatprep.subr.mxu0 0.0
      %817 = vmatpush1.msra.mxu0 0.0
      %818 = vmatprep.subr.mxu0 0.0
      %819 = vmatpush1.msra.mxu0 0.0
      %820 = vmatprep.subr.mxu0 0.0
      %821 = vmatpush1.msra.mxu0 0.0
      %822 = vmatprep.subr.mxu0 0.0
      %823 = vmatpush1.msra.mxu0 0.0
      %824 = vmatprep.subr.mxu0 0.0
      %825 = vmatpush1.msra.mxu0 0.0
      %826 = vmatprep.subr.mxu0 0.0
      %827 = vmatpush1.msra.mxu0 0.0
      %828 = vmatprep.subr.mxu0 0.0
      %829 = vmatpush1.msra.mxu0 0.0
      %830 = vmatprep.subr.mxu0 0.0
      %831 = vmatpush1.msra.mxu0 0.0
      %832 = vmatprep.subr.mxu0 0.0
      %833 = vmatpush1.msra.mxu0 0.0
      %834 = vmatprep.subr.mxu0 0.0
      %835 = vmatpush1.msra.mxu0 0.0
      %836 = vmatprep.subr.mxu0 0.0
      %837 = vmatpush1.msra.mxu0 0.0
      %838 = vmatprep.mubr.f32.mxu0 0.0
      %839 = vmatmul.mubr.f32.gmra.mrb[0].mxu0 %v772
      %v840 = vpop.f32.mrb[0].mxu0
      %v841 = vadd.f32 0.0, %v840
      %v842 = vpop.f32.mrb[0].mxu0
      %v843 = vadd.f32 0.0, %v842
      %844 = vdwg.mxu0
      %845 = vmatprep.subr.mxu0 %v768
      %846 = vmatpush1.msra.mxu0 %v767
      %847 = vmatprep.subr.mxu0 %v529
      %848 = vmatpush1.msra.mxu0 %v527
      %849 = vmatprep.subr.mxu0 %v606
      %850 = vmatpush1.msra.mxu0 %v604
      %851 = vmatprep.subr.mxu0 %v683
      %852 = vmatpush1.msra.mxu0 %v681
      %853 = vmatprep.subr.mxu0 %v760
      %854 = vmatpush1.msra.mxu0 %v758
      %855 = vmatprep.subr.mxu0 %v763
      %856 = vmatpush1.msra.mxu0 %v762
      %857 = vmatprep.subr.mxu0 0.0
      %858 = vmatpush1.msra.mxu0 0.0
      %859 = vmatprep.subr.mxu0 0.0
      %860 = vmatpush1.msra.mxu0 0.0
      %861 = vmatprep.subr.mxu0 0.0
      %862 = vmatpush1.msra.mxu0 0.0
      %863 = vmatprep.subr.mxu0 0.0
      %864 = vmatpush1.msra.mxu0 0.0
      %865 = vmatprep.subr.mxu0 0.0
      %866 = vmatpush1.msra.mxu0 0.0
      %867 = vmatprep.subr.mxu0 0.0
      %868 = vmatpush1.msra.mxu0 0.0
      %869 = vmatprep.subr.mxu0 0.0
      %870 = vmatpush1.msra.mxu0 0.0
      %871 = vmatprep.subr.mxu0 0.0
      %872 = vmatpush1.msra.mxu0 0.0
      %873 = vmatprep.subr.mxu0 0.0
      %874 = vmatpush1.msra.mxu0 0.0
      %875 = vmatprep.subr.mxu0 0.0
      %876 = vmatpush1.msra.mxu0 0.0
      %877 = vmatprep.subr.mxu0 0.0
      %878 = vmatpush1.msra.mxu0 0.0
      %879 = vmatprep.subr.mxu0 0.0
      %880 = vmatpush1.msra.mxu0 0.0
      %881 = vmatprep.subr.mxu0 0.0
      %882 = vmatpush1.msra.mxu0 0.0
      %883 = vmatprep.subr.mxu0 0.0
      %884 = vmatpush1.msra.mxu0 0.0
      %885 = vmatprep.subr.mxu0 0.0
      %886 = vmatpush1.msra.mxu0 0.0
      %887 = vmatprep.subr.mxu0 0.0
      %888 = vmatpush1.msra.mxu0 0.0
      %889 = vmatprep.subr.mxu0 0.0
      %890 = vmatpush1.msra.mxu0 0.0
      %891 = vmatprep.subr.mxu0 0.0
      %892 = vmatpush1.msra.mxu0 0.0
      %893 = vmatprep.subr.mxu0 0.0
      %894 = vmatpush1.msra.mxu0 0.0
      %895 = vmatprep.subr.mxu0 0.0
      %896 = vmatpush1.msra.mxu0 0.0
      %897 = vmatprep.subr.mxu0 0.0
      %898 = vmatpush1.msra.mxu0 0.0
      %899 = vmatprep.subr.mxu0 0.0
      %900 = vmatpush1.msra.mxu0 0.0
      %901 = vmatprep.subr.mxu0 0.0
      %902 = vmatpush1.msra.mxu0 0.0
      %903 = vmatprep.subr.mxu0 0.0
      %904 = vmatpush1.msra.mxu0 0.0
      %905 = vmatprep.subr.mxu0 0.0
      %906 = vmatpush1.msra.mxu0 0.0
      %907 = vmatprep.subr.mxu0 0.0
      %908 = vmatpush1.msra.mxu0 0.0
      %909 = vmatprep.mubr.f32.mxu0 0.0
      %910 = vmatmul.mubr.f32.gmra.mrb[0].mxu0 %v772
      %v911 = vpop.f32.mrb[0].mxu0
      %v912 = vadd.f32 0.0, %v911
      %v913 = vpop.f32.mrb[0].mxu0
      %v914 = vadd.f32 0.0, %v913
      %915 = vdwg.mxu0
      %v916 = vmax.f32 %v841, 0.0
      %v917 = vmax.f32 %v843, 0.0
      %v918 = vmax.f32 %v912, 0.0
      %v919 = vmax.f32 %v914, 0.0
      %v920 = vld [vmem:[%s5] sm:$0xff]
      %v921 = vld [vmem:[%s5 + $0x8] sm:$0xff]
      %v922 = vld [vmem:[%s5 + $0x10] sm:$0xff]
      %v923 = vld [vmem:[%s5 + $0x18] sm:$0xff]
      %v924 = vld [vmem:[%s5 + $0x20] sm:$0xff]
      %v925 = vld [vmem:[%s5 + $0x28] sm:$0xff]
      %v926 = vld [vmem:[%s5 + $0x30] sm:$0xff]
      %v927 = vld [vmem:[%s5 + $0x38] sm:$0xff]
      %v928 = vld [vmem:[%s5 + $0x40] sm:$0xff]
      %v929 = vld [vmem:[%s5 + $0x48] sm:$0xff]
      %vm930 = vcmask 31744
      %v932 = vsel %vm930, %v920, 0
      %v935 = vsel %vm930, %v921, 0
      %v938 = vsel %vm930, %v922, 0
      %v941 = vsel %vm930, %v923, 0
      %v944 = vsel %vm930, %v924, 0
      %v947 = vsel %vm930, %v925, 0
      %v950 = vsel %vm930, %v926, 0
      %v953 = vsel %vm930, %v927, 0
      %v956 = vsel %vm930, %v928, 0
      %v959 = vsel %vm930, %v929, 0
      %vm961 = vcmask 1043456
      %v963 = vsel %vm961, %v916, 0
      %v966 = vsel %vm961, %v917, 0
      %v969 = vsel %vm961, %v918, 0
      %v972 = vsel %vm961, %v919, 0
      %974 = vmatprep.subr.mxu0 %v966
      %975 = vmatpush1.msra.mxu0 %v963
      %976 = vmatprep.subr.mxu0 0.0
      %977 = vmatpush1.msra.mxu0 0.0
      %978 = vmatprep.subr.mxu0 0.0
      %979 = vmatpush1.msra.mxu0 0.0
      %980 = vmatprep.subr.mxu0 0.0
      %981 = vmatpush1.msra.mxu0 0.0
      %982 = vmatprep.subr.mxu0 0.0
      %983 = vmatpush1.msra.mxu0 0.0
      %984 = vmatprep.subr.mxu0 0.0
      %985 = vmatpush1.msra.mxu0 0.0
      %986 = vmatprep.subr.mxu0 0.0
      %987 = vmatpush1.msra.mxu0 0.0
      %988 = vmatprep.subr.mxu0 0.0
      %989 = vmatpush1.msra.mxu0 0.0
      %990 = vmatprep.subr.mxu0 0.0
      %991 = vmatpush1.msra.mxu0 0.0
      %992 = vmatprep.subr.mxu0 0.0
      %993 = vmatpush1.msra.mxu0 0.0
      %994 = vmatprep.subr.mxu0 0.0
      %995 = vmatpush1.msra.mxu0 0.0
      %996 = vmatprep.subr.mxu0 0.0
      %997 = vmatpush1.msra.mxu0 0.0
      %998 = vmatprep.subr.mxu0 0.0
      %999 = vmatpush1.msra.mxu0 0.0
      %1000 = vmatprep.subr.mxu0 0.0
      %1001 = vmatpush1.msra.mxu0 0.0
      %1002 = vmatprep.subr.mxu0 0.0
      %1003 = vmatpush1.msra.mxu0 0.0
      %1004 = vmatprep.subr.mxu0 0.0
      %1005 = vmatpush1.msra.mxu0 0.0
      %1006 = vmatprep.subr.mxu0 0.0
      %1007 = vmatpush1.msra.mxu0 0.0
      %1008 = vmatprep.subr.mxu0 0.0
      %1009 = vmatpush1.msra.mxu0 0.0
      %1010 = vmatprep.subr.mxu0 0.0
      %1011 = vmatpush1.msra.mxu0 0.0
      %1012 = vmatprep.subr.mxu0 0.0
      %1013 = vmatpush1.msra.mxu0 0.0
      %1014 = vmatprep.subr.mxu0 0.0
      %1015 = vmatpush1.msra.mxu0 0.0
      %1016 = vmatprep.subr.mxu0 0.0
      %1017 = vmatpush1.msra.mxu0 0.0
      %1018 = vmatprep.subr.mxu0 0.0
      %1019 = vmatpush1.msra.mxu0 0.0
      %1020 = vmatprep.subr.mxu0 0.0
      %1021 = vmatpush1.msra.mxu0 0.0
      %1022 = vmatprep.subr.mxu0 0.0
      %1023 = vmatpush1.msra.mxu0 0.0
      %1024 = vmatprep.subr.mxu0 0.0
      %1025 = vmatpush1.msra.mxu0 0.0
      %1026 = vmatprep.subr.mxu0 0.0
      %1027 = vmatpush1.msra.mxu0 0.0
      %1028 = vmatprep.subr.mxu0 0.0
      %1029 = vmatpush1.msra.mxu0 0.0
      %1030 = vmatprep.subr.mxu0 0.0
      %1031 = vmatpush1.msra.mxu0 0.0
      %1032 = vmatprep.subr.mxu0 0.0
      %1033 = vmatpush1.msra.mxu0 0.0
      %1034 = vmatprep.subr.mxu0 0.0
      %1035 = vmatpush1.msra.mxu0 0.0
      %1036 = vmatprep.subr.mxu0 0.0
      %1037 = vmatpush1.msra.mxu0 0.0
      %1038 = vmatprep.mubr.f32.mxu0 0.0
      %1039 = vmatmul.mubr.f32.gmra.mrb[0].mxu0 %v932
      %v1040 = vpop.f32.mrb[0].mxu0
      %v1041 = vadd.f32 0.0, %v1040
      %v1042 = vpop.f32.mrb[0].mxu0
      %v1043 = vadd.f32 0.0, %v1042
      %1044 = vmatprep.mubr.f32.mxu0 0.0
      %1045 = vmatmul.mubr.f32.gmra.mrb[0].mxu0 %v935
      %v1046 = vpop.f32.mrb[0].mxu0
      %v1047 = vadd.f32 0.0, %v1046
      %v1048 = vpop.f32.mrb[0].mxu0
      %v1049 = vadd.f32 0.0, %v1048
      %1050 = vmatprep.mubr.f32.mxu0 0.0
      %1051 = vmatmul.mubr.f32.gmra.mrb[0].mxu0 %v938
      %v1052 = vpop.f32.mrb[0].mxu0
      %v1053 = vadd.f32 0.0, %v1052
      %v1054 = vpop.f32.mrb[0].mxu0
      %v1055 = vadd.f32 0.0, %v1054
      %1056 = vmatprep.mubr.f32.mxu0 0.0
      %1057 = vmatmul.mubr.f32.gmra.mrb[0].mxu0 %v941
      %v1058 = vpop.f32.mrb[0].mxu0
      %v1059 = vadd.f32 0.0, %v1058
      %v1060 = vpop.f32.mrb[0].mxu0
      %v1061 = vadd.f32 0.0, %v1060
      %1062 = vmatprep.mubr.f32.mxu0 0.0
      %1063 = vmatmul.mubr.f32.gmra.mrb[0].mxu0 %v944
      %v1064 = vpop.f32.mrb[0].mxu0
      %v1065 = vadd.f32 0.0, %v1064
      %v1066 = vpop.f32.mrb[0].mxu0
      %v1067 = vadd.f32 0.0, %v1066
      %1068 = vmatprep.mubr.f32.mxu0 0.0
      %1069 = vmatmul.mubr.f32.gmra.mrb[0].mxu0 %v947
      %v1070 = vpop.f32.mrb[0].mxu0
      %v1071 = vadd.f32 0.0, %v1070
      %v1072 = vpop.f32.mrb[0].mxu0
      %v1073 = vadd.f32 0.0, %v1072
      %1074 = vmatprep.mubr.f32.mxu0 0.0
      %1075 = vmatmul.mubr.f32.gmra.mrb[0].mxu0 %v950
      %v1076 = vpop.f32.mrb[0].mxu0
      %v1077 = vadd.f32 0.0, %v1076
      %v1078 = vpop.f32.mrb[0].mxu0
      %v1079 = vadd.f32 0.0, %v1078
      %1080 = vmatprep.mubr.f32.mxu0 0.0
      %1081 = vmatmul.mubr.f32.gmra.mrb[0].mxu0 %v953
      %v1082 = vpop.f32.mrb[0].mxu0
      %v1083 = vadd.f32 0.0, %v1082
      %v1084 = vpop.f32.mrb[0].mxu0
      %v1085 = vadd.f32 0.0, %v1084
      %1086 = vmatprep.mubr.f32.mxu0 0.0
      %1087 = vmatmul.mubr.f32.gmra.mrb[0].mxu0 %v956
      %v1088 = vpop.f32.mrb[0].mxu0
      %v1089 = vadd.f32 0.0, %v1088
      %v1090 = vpop.f32.mrb[0].mxu0
      %v1091 = vadd.f32 0.0, %v1090
      %1092 = vmatprep.mubr.f32.mxu0 0.0
      %1093 = vmatmul.mubr.f32.gmra.mrb[0].mxu0 %v959
      %v1094 = vpop.f32.mrb[0].mxu0
      %v1095 = vadd.f32 0.0, %v1094
      %v1096 = vpop.f32.mrb[0].mxu0
      %v1097 = vadd.f32 0.0, %v1096
      %1098 = vdwg.mxu0
      %1099 = vmatprep.subr.mxu0 %v972
      %1100 = vmatpush1.msra.mxu0 %v969
      %1101 = vmatprep.subr.mxu0 0.0
      %1102 = vmatpush1.msra.mxu0 0.0
      %1103 = vmatprep.subr.mxu0 0.0
      %1104 = vmatpush1.msra.mxu0 0.0
      %1105 = vmatprep.subr.mxu0 0.0
      %1106 = vmatpush1.msra.mxu0 0.0
      %1107 = vmatprep.subr.mxu0 0.0
      %1108 = vmatpush1.msra.mxu0 0.0
      %1109 = vmatprep.subr.mxu0 0.0
      %1110 = vmatpush1.msra.mxu0 0.0
      %1111 = vmatprep.subr.mxu0 0.0
      %1112 = vmatpush1.msra.mxu0 0.0
      %1113 = vmatprep.subr.mxu0 0.0
      %1114 = vmatpush1.msra.mxu0 0.0
      %1115 = vmatprep.subr.mxu0 0.0
      %1116 = vmatpush1.msra.mxu0 0.0
      %1117 = vmatprep.subr.mxu0 0.0
      %1118 = vmatpush1.msra.mxu0 0.0
      %1119 = vmatprep.subr.mxu0 0.0
      %1120 = vmatpush1.msra.mxu0 0.0
      %1121 = vmatprep.subr.mxu0 0.0
      %1122 = vmatpush1.msra.mxu0 0.0
      %1123 = vmatprep.subr.mxu0 0.0
      %1124 = vmatpush1.msra.mxu0 0.0
      %1125 = vmatprep.subr.mxu0 0.0
      %1126 = vmatpush1.msra.mxu0 0.0
      %1127 = vmatprep.subr.mxu0 0.0
      %1128 = vmatpush1.msra.mxu0 0.0
      %1129 = vmatprep.subr.mxu0 0.0
      %1130 = vmatpush1.msra.mxu0 0.0
      %1131 = vmatprep.subr.mxu0 0.0
      %1132 = vmatpush1.msra.mxu0 0.0
      %1133 = vmatprep.subr.mxu0 0.0
      %1134 = vmatpush1.msra.mxu0 0.0
      %1135 = vmatprep.subr.mxu0 0.0
      %1136 = vmatpush1.msra.mxu0 0.0
      %1137 = vmatprep.subr.mxu0 0.0
      %1138 = vmatpush1.msra.mxu0 0.0
      %1139 = vmatprep.subr.mxu0 0.0
      %1140 = vmatpush1.msra.mxu0 0.0
      %1141 = vmatprep.subr.mxu0 0.0
      %1142 = vmatpush1.msra.mxu0 0.0
      %1143 = vmatprep.subr.mxu0 0.0
      %1144 = vmatpush1.msra.mxu0 0.0
      %1145 = vmatprep.subr.mxu0 0.0
      %1146 = vmatpush1.msra.mxu0 0.0
      %1147 = vmatprep.subr.mxu0 0.0
      %1148 = vmatpush1.msra.mxu0 0.0
      %1149 = vmatprep.subr.mxu0 0.0
      %1150 = vmatpush1.msra.mxu0 0.0
      %1151 = vmatprep.subr.mxu0 0.0
      %1152 = vmatpush1.msra.mxu0 0.0
      %1153 = vmatprep.subr.mxu0 0.0
      %1154 = vmatpush1.msra.mxu0 0.0
      %1155 = vmatprep.subr.mxu0 0.0
      %1156 = vmatpush1.msra.mxu0 0.0
      %1157 = vmatprep.subr.mxu0 0.0
      %1158 = vmatpush1.msra.mxu0 0.0
      %1159 = vmatprep.subr.mxu0 0.0
      %1160 = vmatpush1.msra.mxu0 0.0
      %1161 = vmatprep.subr.mxu0 0.0
      %1162 = vmatpush1.msra.mxu0 0.0
      %1163 = vmatprep.mubr.f32.mxu0 0.0
      %1164 = vmatmul.mubr.f32.gmra.mrb[0].mxu0 %v932
      %v1165 = vpop.f32.mrb[0].mxu0
      %v1166 = vadd.f32 0.0, %v1165
      %v1167 = vpop.f32.mrb[0].mxu0
      %v1168 = vadd.f32 0.0, %v1167
      %1169 = vmatprep.mubr.f32.mxu0 0.0
      %1170 = vmatmul.mubr.f32.gmra.mrb[0].mxu0 %v935
      %v1171 = vpop.f32.mrb[0].mxu0
      %v1172 = vadd.f32 0.0, %v1171
      %v1173 = vpop.f32.mrb[0].mxu0
      %v1174 = vadd.f32 0.0, %v1173
      %1175 = vmatprep.mubr.f32.mxu0 0.0
      %1176 = vmatmul.mubr.f32.gmra.mrb[0].mxu0 %v938
      %v1177 = vpop.f32.mrb[0].mxu0
      %v1178 = vadd.f32 0.0, %v1177
      %v1179 = vpop.f32.mrb[0].mxu0
      %v1180 = vadd.f32 0.0, %v1179
      %1181 = vmatprep.mubr.f32.mxu0 0.0
      %1182 = vmatmul.mubr.f32.gmra.mrb[0].mxu0 %v941
      %v1183 = vpop.f32.mrb[0].mxu0
      %v1184 = vadd.f32 0.0, %v1183
      %v1185 = vpop.f32.mrb[0].mxu0
      %v1186 = vadd.f32 0.0, %v1185
      %1187 = vmatprep.mubr.f32.mxu0 0.0
      %1188 = vmatmul.mubr.f32.gmra.mrb[0].mxu0 %v944
      %v1189 = vpop.f32.mrb[0].mxu0
      %v1190 = vadd.f32 0.0, %v1189
      %v1191 = vpop.f32.mrb[0].mxu0
      %v1192 = vadd.f32 0.0, %v1191
      %1193 = vmatprep.mubr.f32.mxu0 0.0
      %1194 = vmatmul.mubr.f32.gmra.mrb[0].mxu0 %v947
      %v1195 = vpop.f32.mrb[0].mxu0
      %v1196 = vadd.f32 0.0, %v1195
      %v1197 = vpop.f32.mrb[0].mxu0
      %v1198 = vadd.f32 0.0, %v1197
      %1199 = vmatprep.mubr.f32.mxu0 0.0
      %1200 = vmatmul.mubr.f32.gmra.mrb[0].mxu0 %v950
      %v1201 = vpop.f32.mrb[0].mxu0
      %v1202 = vadd.f32 0.0, %v1201
      %v1203 = vpop.f32.mrb[0].mxu0
      %v1204 = vadd.f32 0.0, %v1203
      %1205 = vmatprep.mubr.f32.mxu0 0.0
      %1206 = vmatmul.mubr.f32.gmra.mrb[0].mxu0 %v953
      %v1207 = vpop.f32.mrb[0].mxu0
      %v1208 = vadd.f32 0.0, %v1207
      %v1209 = vpop.f32.mrb[0].mxu0
      %v1210 = vadd.f32 0.0, %v1209
      %1211 = vmatprep.mubr.f32.mxu0 0.0
      %1212 = vmatmul.mubr.f32.gmra.mrb[0].mxu0 %v956
      %v1213 = vpop.f32.mrb[0].mxu0
      %v1214 = vadd.f32 0.0, %v1213
      %v1215 = vpop.f32.mrb[0].mxu0
      %v1216 = vadd.f32 0.0, %v1215
      %1217 = vmatprep.mubr.f32.mxu0 0.0
      %1218 = vmatmul.mubr.f32.gmra.mrb[0].mxu0 %v959
      %v1219 = vpop.f32.mrb[0].mxu0
      %v1220 = vadd.f32 0.0, %v1219
      %v1221 = vpop.f32.mrb[0].mxu0
      %v1222 = vadd.f32 0.0, %v1221
      %1223 = vdwg.mxu0
      %v1224 = vld [vmem:[%s7] sm:$0xff]
      %1226 = vset.pattern.permute.xlu0 0
      %1227 = vperm.xlu0 %1226, %v1224
      %v1228 = vpop.permute.xlu0 %1227
      %v1230 = vadd.f32 %v1041, %v1228
      %v1231 = vadd.f32 %v1043, %v1228
      %v1232 = vadd.f32 %v1166, %v1228
      %v1233 = vadd.f32 %v1168, %v1228
      %v1234 = vmax.f32 %v1230, 0.0
      %v1235 = vmax.f32 %v1231, 0.0
      %v1236 = vmax.f32 %v1232, 0.0
      %v1237 = vmax.f32 %v1233, 0.0
      %1238 = vrot.lane.b32.xlu0 %v1047, 34
      %v1239 = vpop.permute.xlu0 %1238
      %1240 = vrot.lane.b32.xlu0 %v1049, 34
      %v1241 = vpop.permute.xlu0 %1240
      %1242 = vrot.lane.b32.xlu0 %v1172, 34
      %v1243 = vpop.permute.xlu0 %1242
      %1244 = vrot.lane.b32.xlu0 %v1174, 34
      %v1245 = vpop.permute.xlu0 %1244
      %v1246 = vlaneseq
      %v1247 = vand.u32 %v1246, 127
      %vm1248 = vcmp.lt.s32.totalorder %v1247, 34
      %v1249 = vsel %vm1248, %v1243, %v1245
      %v1250 = vsel %vm1248, %v1241, %v1243
      %v1251 = vsel %vm1248, %v1239, %v1241
      %v1252 = vsel %vm1248, %v1245, %v1239
      %v1253 = vld [vmem:[%s6] sm:$0xf]
      %v1255 = vlaneseq
      %v1256 = vshrl.u32 %v1255, 7
      %v1257 = vsub.s32 0, %v1256
      %v1258 = vrot.slane %v1253, %v1257
      %v1259 = vlaneseq
      %v1260 = vshrl.u32 %v1259, 7
      %v1261 = vsub.s32 1, %v1260
      %v1262 = vrot.slane %v1253, %v1261
      %v1263 = vlaneseq
      %v1264 = vshrl.u32 %v1263, 7
      %v1265 = vsub.s32 2, %v1264
      %v1266 = vrot.slane %v1253, %v1265
      %v1267 = vlaneseq
      %v1268 = vshrl.u32 %v1267, 7
      %v1269 = vsub.s32 3, %v1268
      %v1270 = vrot.slane %v1253, %v1269
      %v1275 = vmul.f32 %v1252, %v1258
      %v1276 = vmul.f32 %v1251, %v1262
      %v1277 = vmul.f32 %v1250, %v1266
      %v1278 = vmul.f32 %v1249, %v1270
      %v1279 = vadd.f32 %v1071, %v1275
      %v1280 = vadd.f32 %v1073, %v1276
      %v1281 = vadd.f32 %v1196, %v1277
      %v1282 = vadd.f32 %v1198, %v1278
      %1283 = vrot.lane.b32.xlu0 %v1053, 32
      %v1284 = vpop.permute.xlu0 %1283
      %1285 = vrot.lane.b32.xlu0 %v1055, 32
      %v1286 = vpop.permute.xlu0 %1285
      %1287 = vrot.lane.b32.xlu0 %v1178, 32
      %v1288 = vpop.permute.xlu0 %1287
      %1289 = vrot.lane.b32.xlu0 %v1180, 32
      %v1290 = vpop.permute.xlu0 %1289
      %vm1291 = vcmp.lt.s32.totalorder %v1247, 32
      %v1292 = vsel %vm1291, %v1288, %v1290
      %v1293 = vsel %vm1291, %v1286, %v1288
      %v1294 = vsel %vm1291, %v1284, %v1286
      %v1295 = vsel %vm1291, %v1290, %v1284
      %s1296 = scalar_lea.vmem %s6, 4
      %v1297 = vld [vmem:[%s1296] sm:$0xf]
      %v1299 = vlaneseq
      %v1300 = vshrl.u32 %v1299, 7
      %v1301 = vsub.s32 0, %v1300
      %v1302 = vrot.slane %v1297, %v1301
      %v1303 = vlaneseq
      %v1304 = vshrl.u32 %v1303, 7
      %v1305 = vsub.s32 1, %v1304
      %v1306 = vrot.slane %v1297, %v1305
      %v1307 = vlaneseq
      %v1308 = vshrl.u32 %v1307, 7
      %v1309 = vsub.s32 2, %v1308
      %v1310 = vrot.slane %v1297, %v1309
      %v1311 = vlaneseq
      %v1312 = vshrl.u32 %v1311, 7
      %v1313 = vsub.s32 3, %v1312
      %v1314 = vrot.slane %v1297, %v1313
      %v1319 = vmul.f32 %v1295, %v1302
      %v1320 = vmul.f32 %v1294, %v1306
      %v1321 = vmul.f32 %v1293, %v1310
      %v1322 = vmul.f32 %v1292, %v1314
      %v1323 = vadd.f32 %v1279, %v1319
      %v1324 = vadd.f32 %v1280, %v1320
      %v1325 = vadd.f32 %v1281, %v1321
      %v1326 = vadd.f32 %v1282, %v1322
      %1327 = vrot.lane.b32.xlu0 %v1059, 30
      %v1328 = vpop.permute.xlu0 %1327
      %1329 = vrot.lane.b32.xlu0 %v1061, 30
      %v1330 = vpop.permute.xlu0 %1329
      %1331 = vrot.lane.b32.xlu0 %v1184, 30
      %v1332 = vpop.permute.xlu0 %1331
      %1333 = vrot.lane.b32.xlu0 %v1186, 30
      %v1334 = vpop.permute.xlu0 %1333
      %vm1335 = vcmp.lt.s32.totalorder %v1247, 30
      %v1336 = vsel %vm1335, %v1332, %v1334
      %v1337 = vsel %vm1335, %v1330, %v1332
      %v1338 = vsel %vm1335, %v1328, %v1330
      %v1339 = vsel %vm1335, %v1334, %v1328
      %s1340 = scalar_lea.vmem %s6, 8
      %v1341 = vld [vmem:[%s1340] sm:$0xf]
      %v1343 = vlaneseq
      %v1344 = vshrl.u32 %v1343, 7
      %v1345 = vsub.s32 0, %v1344
      %v1346 = vrot.slane %v1341, %v1345
      %v1347 = vlaneseq
      %v1348 = vshrl.u32 %v1347, 7
      %v1349 = vsub.s32 1, %v1348
      %v1350 = vrot.slane %v1341, %v1349
      %v1351 = vlaneseq
      %v1352 = vshrl.u32 %v1351, 7
      %v1353 = vsub.s32 2, %v1352
      %v1354 = vrot.slane %v1341, %v1353
      %v1355 = vlaneseq
      %v1356 = vshrl.u32 %v1355, 7
      %v1357 = vsub.s32 3, %v1356
      %v1358 = vrot.slane %v1341, %v1357
      %v1363 = vmul.f32 %v1339, %v1346
      %v1364 = vmul.f32 %v1338, %v1350
      %v1365 = vmul.f32 %v1337, %v1354
      %v1366 = vmul.f32 %v1336, %v1358
      %v1367 = vadd.f32 %v1323, %v1363
      %v1368 = vadd.f32 %v1324, %v1364
      %v1369 = vadd.f32 %v1325, %v1365
      %v1370 = vadd.f32 %v1326, %v1366
      %1371 = vrot.lane.b32.xlu0 %v1065, 2
      %v1372 = vpop.permute.xlu0 %1371
      %1373 = vrot.lane.b32.xlu0 %v1067, 2
      %v1374 = vpop.permute.xlu0 %1373
      %1375 = vrot.lane.b32.xlu0 %v1190, 2
      %v1376 = vpop.permute.xlu0 %1375
      %1377 = vrot.lane.b32.xlu0 %v1192, 2
      %v1378 = vpop.permute.xlu0 %1377
      %vm1379 = vcmp.lt.s32.totalorder %v1247, 2
      %v1380 = vsel %vm1379, %v1376, %v1378
      %v1381 = vsel %vm1379, %v1374, %v1376
      %v1382 = vsel %vm1379, %v1372, %v1374
      %v1383 = vsel %vm1379, %v1378, %v1372
      %s1384 = scalar_lea.vmem %s6, 12
      %v1385 = vld [vmem:[%s1384] sm:$0xf]
      %v1387 = vlaneseq
      %v1388 = vshrl.u32 %v1387, 7
      %v1389 = vsub.s32 0, %v1388
      %v1390 = vrot.slane %v1385, %v1389
      %v1391 = vlaneseq
      %v1392 = vshrl.u32 %v1391, 7
      %v1393 = vsub.s32 1, %v1392
      %v1394 = vrot.slane %v1385, %v1393
      %v1395 = vlaneseq
      %v1396 = vshrl.u32 %v1395, 7
      %v1397 = vsub.s32 2, %v1396
      %v1398 = vrot.slane %v1385, %v1397
      %v1399 = vlaneseq
      %v1400 = vshrl.u32 %v1399, 7
      %v1401 = vsub.s32 3, %v1400
      %v1402 = vrot.slane %v1385, %v1401
      %v1407 = vmul.f32 %v1383, %v1390
      %v1408 = vmul.f32 %v1382, %v1394
      %v1409 = vmul.f32 %v1381, %v1398
      %v1410 = vmul.f32 %v1380, %v1402
      %v1411 = vadd.f32 %v1367, %v1407
      %v1412 = vadd.f32 %v1368, %v1408
      %v1413 = vadd.f32 %v1369, %v1409
      %v1414 = vadd.f32 %v1370, %v1410
      %1415 = vrot.lane.b32.xlu0 %v1077, 126
      %v1416 = vpop.permute.xlu0 %1415
      %1417 = vrot.lane.b32.xlu0 %v1079, 126
      %v1418 = vpop.permute.xlu0 %1417
      %1419 = vrot.lane.b32.xlu0 %v1202, 126
      %v1420 = vpop.permute.xlu0 %1419
      %1421 = vrot.lane.b32.xlu0 %v1204, 126
      %v1422 = vpop.permute.xlu0 %1421
      %vm1423 = vcmp.lt.s32.totalorder %v1247, 126
      %v1424 = vsel %vm1423, %v1420, %v1422
      %v1425 = vsel %vm1423, %v1418, %v1420
      %v1426 = vsel %vm1423, %v1416, %v1418
      %v1427 = vsel %vm1423, %v1422, %v1416
      %s1428 = scalar_lea.vmem %s6, 20
      %v1429 = vld [vmem:[%s1428] sm:$0xf]
      %v1431 = vlaneseq
      %v1432 = vshrl.u32 %v1431, 7
      %v1433 = vsub.s32 0, %v1432
      %v1434 = vrot.slane %v1429, %v1433
      %v1435 = vlaneseq
      %v1436 = vshrl.u32 %v1435, 7
      %v1437 = vsub.s32 1, %v1436
      %v1438 = vrot.slane %v1429, %v1437
      %v1439 = vlaneseq
      %v1440 = vshrl.u32 %v1439, 7
      %v1441 = vsub.s32 2, %v1440
      %v1442 = vrot.slane %v1429, %v1441
      %v1443 = vlaneseq
      %v1444 = vshrl.u32 %v1443, 7
      %v1445 = vsub.s32 3, %v1444
      %v1446 = vrot.slane %v1429, %v1445
      %v1451 = vmul.f32 %v1426, %v1434
      %v1452 = vmul.f32 %v1425, %v1438
      %v1453 = vmul.f32 %v1424, %v1442
      %v1454 = vmul.f32 %v1427, %v1446
      %v1455 = vadd.f32 %v1411, %v1451
      %v1456 = vadd.f32 %v1412, %v1452
      %v1457 = vadd.f32 %v1413, %v1453
      %v1458 = vadd.f32 %v1414, %v1454
      %1459 = vrot.lane.b32.xlu0 %v1083, 98
      %v1460 = vpop.permute.xlu0 %1459
      %1461 = vrot.lane.b32.xlu0 %v1085, 98
      %v1462 = vpop.permute.xlu0 %1461
      %1463 = vrot.lane.b32.xlu0 %v1208, 98
      %v1464 = vpop.permute.xlu0 %1463
      %1465 = vrot.lane.b32.xlu0 %v1210, 98
      %v1466 = vpop.permute.xlu0 %1465
      %vm1467 = vcmp.lt.s32.totalorder %v1247, 98
      %v1468 = vsel %vm1467, %v1464, %v1466
      %v1469 = vsel %vm1467, %v1462, %v1464
      %v1470 = vsel %vm1467, %v1460, %v1462
      %v1471 = vsel %vm1467, %v1466, %v1460
      %s1472 = scalar_lea.vmem %s6, 24
      %v1473 = vld [vmem:[%s1472] sm:$0xf]
      %v1475 = vlaneseq
      %v1476 = vshrl.u32 %v1475, 7
      %v1477 = vsub.s32 0, %v1476
      %v1478 = vrot.slane %v1473, %v1477
      %v1479 = vlaneseq
      %v1480 = vshrl.u32 %v1479, 7
      %v1481 = vsub.s32 1, %v1480
      %v1482 = vrot.slane %v1473, %v1481
      %v1483 = vlaneseq
      %v1484 = vshrl.u32 %v1483, 7
      %v1485 = vsub.s32 2, %v1484
      %v1486 = vrot.slane %v1473, %v1485
      %v1487 = vlaneseq
      %v1488 = vshrl.u32 %v1487, 7
      %v1489 = vsub.s32 3, %v1488
      %v1490 = vrot.slane %v1473, %v1489
      %v1495 = vmul.f32 %v1470, %v1478
      %v1496 = vmul.f32 %v1469, %v1482
      %v1497 = vmul.f32 %v1468, %v1486
      %v1498 = vmul.f32 %v1471, %v1490
      %v1499 = vadd.f32 %v1455, %v1495
      %v1500 = vadd.f32 %v1456, %v1496
      %v1501 = vadd.f32 %v1457, %v1497
      %v1502 = vadd.f32 %v1458, %v1498
      %1503 = vrot.lane.b32.xlu0 %v1089, 96
      %v1504 = vpop.permute.xlu0 %1503
      %1505 = vrot.lane.b32.xlu0 %v1091, 96
      %v1506 = vpop.permute.xlu0 %1505
      %1507 = vrot.lane.b32.xlu0 %v1214, 96
      %v1508 = vpop.permute.xlu0 %1507
      %1509 = vrot.lane.b32.xlu0 %v1216, 96
      %v1510 = vpop.permute.xlu0 %1509
      %vm1511 = vcmp.lt.s32.totalorder %v1247, 96
      %v1512 = vsel %vm1511, %v1508, %v1510
      %v1513 = vsel %vm1511, %v1506, %v1508
      %v1514 = vsel %vm1511, %v1504, %v1506
      %v1515 = vsel %vm1511, %v1510, %v1504
      %s1516 = scalar_lea.vmem %s6, 28
      %v1517 = vld [vmem:[%s1516] sm:$0xf]
      %v1519 = vlaneseq
      %v1520 = vshrl.u32 %v1519, 7
      %v1521 = vsub.s32 0, %v1520
      %v1522 = vrot.slane %v1517, %v1521
      %v1523 = vlaneseq
      %v1524 = vshrl.u32 %v1523, 7
      %v1525 = vsub.s32 1, %v1524
      %v1526 = vrot.slane %v1517, %v1525
      %v1527 = vlaneseq
      %v1528 = vshrl.u32 %v1527, 7
      %v1529 = vsub.s32 2, %v1528
      %v1530 = vrot.slane %v1517, %v1529
      %v1531 = vlaneseq
      %v1532 = vshrl.u32 %v1531, 7
      %v1533 = vsub.s32 3, %v1532
      %v1534 = vrot.slane %v1517, %v1533
      %v1539 = vmul.f32 %v1514, %v1522
      %v1540 = vmul.f32 %v1513, %v1526
      %v1541 = vmul.f32 %v1512, %v1530
      %v1542 = vmul.f32 %v1515, %v1534
      %v1543 = vadd.f32 %v1499, %v1539
      %v1544 = vadd.f32 %v1500, %v1540
      %v1545 = vadd.f32 %v1501, %v1541
      %v1546 = vadd.f32 %v1502, %v1542
      %1547 = vrot.lane.b32.xlu0 %v1095, 94
      %v1548 = vpop.permute.xlu0 %1547
      %1549 = vrot.lane.b32.xlu0 %v1097, 94
      %v1550 = vpop.permute.xlu0 %1549
      %1551 = vrot.lane.b32.xlu0 %v1220, 94
      %v1552 = vpop.permute.xlu0 %1551
      %1553 = vrot.lane.b32.xlu0 %v1222, 94
      %v1554 = vpop.permute.xlu0 %1553
      %vm1555 = vcmp.lt.s32.totalorder %v1247, 94
      %v1556 = vsel %vm1555, %v1552, %v1554
      %v1557 = vsel %vm1555, %v1550, %v1552
      %v1558 = vsel %vm1555, %v1548, %v1550
      %v1559 = vsel %vm1555, %v1554, %v1548
      %s1560 = scalar_lea.vmem %s6, 32
      %v1561 = vld [vmem:[%s1560] sm:$0xf]
      %v1563 = vlaneseq
      %v1564 = vshrl.u32 %v1563, 7
      %v1565 = vsub.s32 0, %v1564
      %v1566 = vrot.slane %v1561, %v1565
      %v1567 = vlaneseq
      %v1568 = vshrl.u32 %v1567, 7
      %v1569 = vsub.s32 1, %v1568
      %v1570 = vrot.slane %v1561, %v1569
      %v1571 = vlaneseq
      %v1572 = vshrl.u32 %v1571, 7
      %v1573 = vsub.s32 2, %v1572
      %v1574 = vrot.slane %v1561, %v1573
      %v1575 = vlaneseq
      %v1576 = vshrl.u32 %v1575, 7
      %v1577 = vsub.s32 3, %v1576
      %v1578 = vrot.slane %v1561, %v1577
      %v1583 = vmul.f32 %v1558, %v1566
      %v1584 = vmul.f32 %v1557, %v1570
      %v1585 = vmul.f32 %v1556, %v1574
      %v1586 = vmul.f32 %v1559, %v1578
      %v1587 = vadd.f32 %v1543, %v1583
      %v1588 = vadd.f32 %v1544, %v1584
      %v1589 = vadd.f32 %v1545, %v1585
      %v1590 = vadd.f32 %v1546, %v1586
      %v1591 = vld [vmem:[%s8] sm:$0xff]
      %1593 = vset.pattern.permute.xlu0 0
      %1594 = vperm.xlu0 %1593, %v1591
      %v1595 = vpop.permute.xlu0 %1594
      %v1597 = vadd.f32 %v1587, %v1595
      %v1598 = vadd.f32 %v1588, %v1595
      %v1599 = vadd.f32 %v1589, %v1595
      %v1600 = vadd.f32 %v1590, %v1595
      %v1601 = vmax.f32 %v1597, 0.0
      %v1602 = vmax.f32 %v1598, 0.0
      %v1603 = vmax.f32 %v1599, 0.0
      %v1604 = vmax.f32 %v1600, 0.0
      %v1605 = vadd.f32 %v1234, %v1601
      %v1606 = vadd.f32 %v1235, %v1602
      %v1607 = vadd.f32 %v1236, %v1603
      %v1608 = vadd.f32 %v1237, %v1604
      %1609 = vst [vmem:[%s361] sm:$0xff] %v1605
      %1610 = vst [vmem:[%s361 + $0x8] sm:$0xff] %v1606
      %s1611 = scalar_lea.vmem %s361, 16
      %1612 = vst [vmem:[%s1611] sm:$0xff] %v1607
      %1613 = vst [vmem:[%s1611 + $0x8] sm:$0xff] %v1608
      %s1614 = smul.u32 2, %s20
      %p1615 = scmp.lt.s32.totalorder %s1614, 3
      %s1616 = scalar_select %p1615, %s1614, 3
      %s1617 = smul.addr %s1616, 2
      %s1618 = smul.addr %s1617, 8
      %s1619 = scalar_lea.vmem %s9, %s1618
      // Predicated region
      $region57: #{msa_block_01_forward.1} parent=55 // pred_check
        %p1620 = pneg %p237
      $region58: #{msa_block_01_forward.1} parent=55 // pred_check_branch
        %1622 = sbr.rel (%p1620) target = $region60
      $region59: #{msa_block_01_forward.1} parent=55 // pred_region
        %s1623 = smul.u32 2, %s20
      $region60: #{msa_block_01_forward.1} parent=55 // pred_fallthru
        _
    $region56: #{msa_block_01_forward.1} parent=5 // pred_fallthru
      _
    %p1624 = scmp.le.s32.totalorder 2, %s15
    // Predicated region
    $region61: #{msa_block_01_forward.1} parent=5 // pred_check
      %p1625 = pneg %p1624
    $region62: #{msa_block_01_forward.1} parent=5 // pred_check_branch
      %1627 = sbr.rel (%p1625) target = $region64
    $region63: #{msa_block_01_forward.1} parent=5 // pred_region
      %s1628 = ssub.s32 %s15, 2
      // Predicated region
      $region65: #{msa_block_01_forward.1} parent=63 // pred_check
        %p1629 = pneg %p243
      $region66: #{msa_block_01_forward.1} parent=63 // pred_check_branch
        %1631 = sbr.rel (%p1629) target = $region68
      $region67: #{msa_block_01_forward.1} parent=63 // pred_region
        %s1632 = smul.u32 2, %s21
        %p1633 = scmp.lt.s32.totalorder %s1632, 3
        %s1634 = scalar_select %p1633, %s1632, 3
        %s1635 = smul.addr %s1634, 2
        %s1636 = smul.addr %s1635, 8
        %s1637 = scalar_lea.vmem %s9, %s1636
      $region68: #{msa_block_01_forward.1} parent=63 // pred_fallthru
        _
    $region64: #{msa_block_01_forward.1} parent=5 // pred_fallthru
      _
  $region6: #{msa_block_01_forward.1} parent=0 // loop_footer
    %s19 = sadd.s32 1, %s15
  $region7: #{msa_block_01_forward.1} parent=0 // loop_footer_branch
    %14 = sbr.rel target = $region3
  $region8: #{msa_block_01_forward.1} parent=0 // loop_exit
    _

</llo_original>
